<compile_context>
chip_gen: v7x
topology: tpu7x:2x2x1
jax: 0.10.0
libtpu: 0.0.40
codegen_flags: <defaults>
</compile_context>

<pallas_src>
import functools

import jax
import jax.numpy as jnp
import numpy as np
from jax.experimental import pallas as pl
from jax.experimental.pallas import tpu as pltpu

BN_EPS = 1e-3


# ------------------------------- Pallas kernel ------------------------------ #

def _fused_convresnet_kernel(x_ref, ein_ref, eslab_ref,
                             w_init_ref, b_init_ref,
                             scales_ref, shifts_ref, w_blk_ref, b_blk_ref,
                             w_fin_ref, b_fin_ref,
                             o_ref, col_ref,
                             *, num_blocks, K, Wout):
    """Whole ConvResidualNet forward on one VMEM-resident tile.

    x_ref     : (Cin_p, N*L)      input, batch folded into lanes
    ein_ref   : (N*L, Wext)       0/1 matrix: flat -> per-batch zero-padded layout
    eslab_ref : (Wout, Wext)      0/1 matrix: conv-output slab -> padded layout
    w_init_ref: (Chid, K*Cin_p)   im2col-flattened weights, b_init_ref: (Chid,1)
    scales/shifts_ref: (2*nb, Chid, 1)   fused eval-mode BatchNorm
    w_blk_ref : (2*nb, Chid, K*Chid), b_blk_ref: (2*nb, Chid, 1)
    w_fin_ref : (Cout, K*Chid),      b_fin_ref : (Cout, 1)
    o_ref     : (Cout, Wout)      output slab (batch n data at columns n*Lp+l)
    col_ref   : (K*Cmax, Wout)    VMEM scratch holding the im2col tile
    """
    f32 = jnp.float32

    def conv(ext, w_flat, b):
        # ext: (C, Wext), already zero 'same'-padded per batch element.
        # Build the im2col tile from K statically shifted lane slices, then
        # run a single MXU matmul with contraction dim K*C.
        C = ext.shape[0]
        for dk in range(K):                      # K is small and static
            col_ref[dk * C:(dk + 1) * C, :] = ext[:, dk:dk + Wout]
        return jnp.dot(w_flat, col_ref[0:K * C, :],
                       preferred_element_type=f32) + b

    e_slab = eslab_ref[...]

    # Initial conv: embed flat (Cin_p, N*L) into the padded layout on the MXU.
    ext0 = jnp.dot(x_ref[...], ein_ref[...], preferred_element_type=f32)
    t = conv(ext0, w_init_ref[...], b_init_ref[...])

    # Residual blocks.  BN uses running stats (eval mode) -> per-channel
    # scale/shift; dropout is identity.
    for i in range(num_blocks):
        j0, j1 = 2 * i, 2 * i + 1
        a = jnp.maximum(t * scales_ref[j0] + shifts_ref[j0], 0.0)
        a = conv(jnp.dot(a, e_slab, preferred_element_type=f32),
                 w_blk_ref[j0], b_blk_ref[j0])
        a = jnp.maximum(a * scales_ref[j1] + shifts_ref[j1], 0.0)
        # TODO(synk): dropout is identity in eval mode; not implemented.
        a = conv(jnp.dot(a, e_slab, preferred_element_type=f32),
                 w_blk_ref[j1], b_blk_ref[j1])
        t = t + a

    # Final conv.
    out = conv(jnp.dot(t, e_slab, preferred_element_type=f32),
               w_fin_ref[...], b_fin_ref[...])
    o_ref[...] = out.astype(o_ref.dtype)


# ------------------------------ Pallas wrapper ------------------------------ #

def _bn_scale_shift(bn):
    scale = bn["gamma"] / jnp.sqrt(bn["var"] + BN_EPS)
    shift = bn["beta"] - bn["mean"] * scale
    return scale, shift


def _round_up(v, m):
    return ((v + m - 1) // m) * m


def _flatten_conv_w(w, cin_pad):
    """(Cout, Cin, K) -> (Cout, K*cin_pad) matching im2col row order (dk, cin)."""
    cout, cin, k = w.shape
    if cin_pad > cin:
        w = jnp.pad(w, ((0, 0), (0, cin_pad - cin), (0, 0)))
    return jnp.transpose(w, (0, 2, 1)).reshape(cout, k * cin_pad)


def conv_residual_net_forward(x, params):
    """x: (N, Cin, L) float32 -> (N, Cout, L).  One fused pallas_call."""
    N, Cin, L = x.shape
    w_init = params["initial"]["w"]                  # (Chid, Cin, K)
    Chid, _, K = w_init.shape
    w_fin = params["final"]["w"]                     # (Cout, Chid, K)
    Cout = w_fin.shape[0]
    nb = len(params["blocks"])

    p = (K - 1) // 2
    Lp = L + 2 * p                                   # per-batch padded length
    NL = N * L
    Wout = _round_up(N * Lp - 2 * p, 8)              # conv-output slab width
    Wext = Wout + 2 * p                              # padded-layout width
    Cin_p = _round_up(max(Cin, 8), 8)
    Cmax = max(Cin_p, Chid)

    # Constant 0/1 embedding matrices (exact; applied on the MXU in-kernel).
    e_in = np.zeros((NL, Wext), np.float32)          # flat column n*L + l
    e_slab = np.zeros((Wout, Wext), np.float32)      # slab column n*Lp + l
    for n in range(N):
        for l in range(L):
            e_in[n * L + l, n * Lp + p + l] = 1.0
            e_slab[n * Lp + l, n * Lp + p + l] = 1.0
    e_in = jnp.asarray(e_in)
    e_slab = jnp.asarray(e_slab)

    # Input: pad channels to a sublane multiple, fold batch into lanes.
    x_p = jnp.pad(x, ((0, 0), (0, Cin_p - Cin), (0, 0)))
    x_flat = jnp.transpose(x_p, (1, 0, 2)).reshape(Cin_p, NL)

    w_init_f = _flatten_conv_w(w_init, Cin_p)
    b_init = params["initial"]["b"].reshape(Chid, 1)
    w_fin_f = _flatten_conv_w(w_fin, Chid)
    b_fin = params["final"]["b"].reshape(Cout, 1)

    # Stack every block's fused-BN and conv parameters once -> resident in VMEM.
    scales, shifts, w_blks, b_blks = [], [], [], []
    for blk in params["blocks"]:
        for bn_name, cv_name in (("bn0", "conv0"), ("bn1", "conv1")):
            s, h = _bn_scale_shift(blk[bn_name])
            scales.append(s.reshape(Chid, 1))
            shifts.append(h.reshape(Chid, 1))
            w_blks.append(_flatten_conv_w(blk[cv_name]["w"], Chid))
            b_blks.append(blk[cv_name]["b"].reshape(Chid, 1))
    if nb > 0:
        scales, shifts = jnp.stack(scales), jnp.stack(shifts)
        w_blks, b_blks = jnp.stack(w_blks), jnp.stack(b_blks)
    else:  # dummies, never read inside the kernel
        scales = jnp.zeros((1, Chid, 1), jnp.float32)
        shifts = jnp.zeros((1, Chid, 1), jnp.float32)
        w_blks = jnp.zeros((1, Chid, K * Chid), jnp.float32)
        b_blks = jnp.zeros((1, Chid, 1), jnp.float32)

    kernel = functools.partial(_fused_convresnet_kernel,
                               num_blocks=nb, K=K, Wout=Wout)

    out_slab = pl.pallas_call(
        kernel,
        out_shape=jax.ShapeDtypeStruct((Cout, Wout), x.dtype),
        scratch_shapes=[pltpu.VMEM((K * Cmax, Wout), jnp.float32)],
    )(x_flat, e_in, e_slab, w_init_f, b_init,
      scales, shifts, w_blks, b_blks, w_fin_f, b_fin)

    # Un-fold: valid data for batch n sits at slab columns [n*Lp, n*Lp + L).
    return jnp.stack([out_slab[:, n * Lp:n * Lp + L] for n in range(N)], axis=0)


# --------------------------- parameter construction ------------------------- #

def _init_conv(key, cout, cin, k, bound=None):
    wk, bk = jax.random.split(key)
    if bound is None:
        bound = 1.0 / np.sqrt(cin * k)               # PyTorch default init
    w = jax.random.uniform(wk, (cout, cin, k), jnp.float32, -bound, bound)
    b = jax.random.uniform(bk, (cout,), jnp.float32, -bound, bound)
    return {"w": w, "b": b}


def _init_bn(key, c):
    k1, k2, k3, k4 = jax.random.split(key, 4)
    return {
        "gamma": 1.0 + 0.1 * jax.random.normal(k1, (c,), jnp.float32),
        "beta": 0.1 * jax.random.normal(k2, (c,), jnp.float32),
        "mean": 0.1 * jax.random.normal(k3, (c,), jnp.float32),
        "var": 1.0 + 0.1 * jnp.abs(jax.random.normal(k4, (c,), jnp.float32)),
    }


def init_params(key, in_channels, out_channels, hidden_channels, num_blocks,
                kernel_size):
    keys = jax.random.split(key, 2 + num_blocks)
    params = {
        "initial": _init_conv(keys[0], hidden_channels, in_channels, kernel_size),
        "final": _init_conv(keys[1], out_channels, hidden_channels, kernel_size),
        "blocks": [],
    }
    for i in range(num_blocks):
        bk = jax.random.split(keys[2 + i], 4)
        params["blocks"].append({
            "bn0": _init_bn(bk[0], hidden_channels),
            "bn1": _init_bn(bk[1], hidden_channels),
            "conv0": _init_conv(bk[2], hidden_channels, hidden_channels,
                                kernel_size),
            # last conv of each block is zero-initialized (uniform +-1e-3)
            "conv1": _init_conv(bk[3], hidden_channels, hidden_channels,
                                kernel_size, bound=1e-3),
        })
    return params


# ------------------------------ pure-JAX reference -------------------------- #

def _conv1d_ref(x, w, b):
    k = w.shape[2]
    pad = (k - 1) // 2
    y = jax.lax.conv_general_dilated(
        x, w, window_strides=(1,), padding=[(pad, k - 1 - pad)],
        dimension_numbers=("NCH", "OIH", "NCH"))
    return y + b[None, :, None]


def _ref_forward(x, params):
    t = _conv1d_ref(x, params["initial"]["w"], params["initial"]["b"])
    for blk in params["blocks"]:
        s0, h0 = _bn_scale_shift(blk["bn0"])
        s1, h1 = _bn_scale_shift(blk["bn1"])
        a = jnp.maximum(t * s0[None, :, None] + h0[None, :, None], 0.0)
        a = _conv1d_ref(a, blk["conv0"]["w"], blk["conv0"]["b"])
        a = jnp.maximum(a * s1[None, :, None] + h1[None, :, None], 0.0)
        a = _conv1d_ref(a, blk["conv1"]["w"], blk["conv1"]["b"])
        t = t + a
    return _conv1d_ref(t, params["final"]["w"], params["final"]["b"])


# ----------------------------------- main ------------------------------------ #

if __name__ == "__main__":
    N, IN_C, OUT_C, HID, BLOCKS, K, L = 2, 4, 4, 32, 2, 3, 16

    key = jax.random.PRNGKey(0)
    pkey, xkey = jax.random.split(key)
    params = init_params(pkey, IN_C, OUT_C, HID, BLOCKS, K)
    x = jax.random.normal(xkey, (N, IN_C, L), jnp.float32)

    fwd = jax.jit(conv_residual_net_forward)
    out = jax.block_until_ready(fwd(x, params))
    ref = jax.block_until_ready(_ref_forward(x, params))

    assert out.shape == (N, OUT_C, L), out.shape
    np.testing.assert_allclose(np.asarray(out), np.asarray(ref),
                               rtol=1e-4, atol=1e-4)
    print("KERNEL_OK")
</pallas_src>

<mosaic_0001>
module attributes {stable_mosaic.version = 11 : i64} {
  func.func @_fused_convresnet_kernel(%arg0: memref<8x32xf32, #tpu.memory_space<vmem>>, %arg1: memref<32x42xf32, #tpu.memory_space<vmem>>, %arg2: memref<40x42xf32, #tpu.memory_space<vmem>>, %arg3: memref<32x24xf32, #tpu.memory_space<vmem>>, %arg4: memref<32x1xf32, #tpu.memory_space<vmem>>, %arg5: memref<4x32x1xf32, #tpu.memory_space<vmem>>, %arg6: memref<4x32x1xf32, #tpu.memory_space<vmem>>, %arg7: memref<4x32x96xf32, #tpu.memory_space<vmem>>, %arg8: memref<4x32x1xf32, #tpu.memory_space<vmem>>, %arg9: memref<4x96xf32, #tpu.memory_space<vmem>>, %arg10: memref<4x1xf32, #tpu.memory_space<vmem>>, %arg11: memref<4x40xf32, #tpu.memory_space<vmem>>, %arg12: memref<96x40xf32, #tpu.memory_space<vmem>>) attributes {dimension_semantics = [], scalar_prefetch = 0 : i64, scratch_operands = 1 : i64, tpu.core_type = #tpu.core_type<tc>} {
    %c0 = arith.constant 0 : index
    %c0_0 = arith.constant 0 : index
    %0 = vector.load %arg2[%c0, %c0_0] : memref<40x42xf32, #tpu.memory_space<vmem>>, vector<40x42xf32>
    %c0_1 = arith.constant 0 : index
    %c0_2 = arith.constant 0 : index
    %1 = vector.load %arg0[%c0_1, %c0_2] : memref<8x32xf32, #tpu.memory_space<vmem>>, vector<8x32xf32>
    %c0_3 = arith.constant 0 : index
    %c0_4 = arith.constant 0 : index
    %2 = vector.load %arg1[%c0_3, %c0_4] : memref<32x42xf32, #tpu.memory_space<vmem>>, vector<32x42xf32>
    %cst = arith.constant dense<0.000000e+00> : vector<8x42xf32>
    %3 = tpu.matmul %1, %2, %cst {dimension_numbers = #tpu.dot_dimension_numbers<[1], [0], [0], [1], [0, 0, 1, 1], [], []>} : vector<8x32xf32>, vector<32x42xf32>, vector<8x42xf32> -> vector<8x42xf32>
    %c0_5 = arith.constant 0 : index
    %c0_6 = arith.constant 0 : index
    %4 = vector.load %arg3[%c0_5, %c0_6] : memref<32x24xf32, #tpu.memory_space<vmem>>, vector<32x24xf32>
    %c0_7 = arith.constant 0 : index
    %c0_8 = arith.constant 0 : index
    %5 = vector.load %arg4[%c0_7, %c0_8] : memref<32x1xf32, #tpu.memory_space<vmem>>, vector<32x1xf32>
    %6 = vector.extract_strided_slice %3 {offsets = [0, 0], sizes = [8, 40], strides = [1, 1]} : vector<8x42xf32> to vector<8x40xf32>
    %c0_9 = arith.constant 0 : index
    %c0_10 = arith.constant 0 : index
    %7 = vector.load %arg12[%c0_9, %c0_10] : memref<96x40xf32, #tpu.memory_space<vmem>>, vector<8x40xf32>
    tpu.vector_store %arg12[%c0_9, %c0_10], %6 {strides = array<i32>} : memref<96x40xf32, #tpu.memory_space<vmem>>, vector<8x40xf32>,
    %8 = vector.extract_strided_slice %3 {offsets = [0, 1], sizes = [8, 40], strides = [1, 1]} : vector<8x42xf32> to vector<8x40xf32>
    %c8 = arith.constant 8 : index
    %c0_11 = arith.constant 0 : index
    %9 = vector.load %arg12[%c8, %c0_11] : memref<96x40xf32, #tpu.memory_space<vmem>>, vector<8x40xf32>
    tpu.vector_store %arg12[%c8, %c0_11], %8 {strides = array<i32>} : memref<96x40xf32, #tpu.memory_space<vmem>>, vector<8x40xf32>,
    %10 = vector.extract_strided_slice %3 {offsets = [0, 2], sizes = [8, 40], strides = [1, 1]} : vector<8x42xf32> to vector<8x40xf32>
    %c16 = arith.constant 16 : index
    %c0_12 = arith.constant 0 : index
    %11 = vector.load %arg12[%c16, %c0_12] : memref<96x40xf32, #tpu.memory_space<vmem>>, vector<8x40xf32>
    tpu.vector_store %arg12[%c16, %c0_12], %10 {strides = array<i32>} : memref<96x40xf32, #tpu.memory_space<vmem>>, vector<8x40xf32>,
    %c0_13 = arith.constant 0 : index
    %c0_14 = arith.constant 0 : index
    %12 = vector.load %arg12[%c0_13, %c0_14] : memref<96x40xf32, #tpu.memory_space<vmem>>, vector<24x40xf32>
    %cst_15 = arith.constant dense<0.000000e+00> : vector<32x40xf32>
    %13 = tpu.matmul %4, %12, %cst_15 {dimension_numbers = #tpu.dot_dimension_numbers<[1], [0], [0], [1], [0, 0, 1, 1], [], []>} : vector<32x24xf32>, vector<24x40xf32>, vector<32x40xf32> -> vector<32x40xf32>
    %14 = vector.broadcast %5 : vector<32x1xf32> to vector<32x40xf32>
    %15 = arith.addf %13, %14 : vector<32x40xf32>
    %c0_16 = arith.constant 0 : index
    %c0_17 = arith.constant 0 : index
    %c0_18 = arith.constant 0 : index
    %16 = vector.load %arg5[%c0_16, %c0_17, %c0_18] : memref<4x32x1xf32, #tpu.memory_space<vmem>>, vector<1x32x1xf32>
    %17 = vector.shape_cast %16 : vector<1x32x1xf32> to vector<32x1xf32>
    %18 = vector.broadcast %17 : vector<32x1xf32> to vector<32x40xf32>
    %19 = arith.mulf %15, %18 : vector<32x40xf32>
    %c0_19 = arith.constant 0 : index
    %c0_20 = arith.constant 0 : index
    %c0_21 = arith.constant 0 : index
    %20 = vector.load %arg6[%c0_19, %c0_20, %c0_21] : memref<4x32x1xf32, #tpu.memory_space<vmem>>, vector<1x32x1xf32>
    %21 = vector.shape_cast %20 : vector<1x32x1xf32> to vector<32x1xf32>
    %22 = vector.broadcast %21 : vector<32x1xf32> to vector<32x40xf32>
    %23 = arith.addf %19, %22 : vector<32x40xf32>
    %cst_22 = arith.constant 0.000000e+00 : f32
    %24 = vector.broadcast %cst_22 : f32 to vector<32x40xf32>
    %25 = arith.maximumf %23, %24 : vector<32x40xf32>
    %cst_23 = arith.constant dense<0.000000e+00> : vector<32x42xf32>
    %26 = tpu.matmul %25, %0, %cst_23 {dimension_numbers = #tpu.dot_dimension_numbers<[1], [0], [0], [1], [0, 0, 1, 1], [], []>} : vector<32x40xf32>, vector<40x42xf32>, vector<32x42xf32> -> vector<32x42xf32>
    %c0_24 = arith.constant 0 : index
    %c0_25 = arith.constant 0 : index
    %c0_26 = arith.constant 0 : index
    %27 = vector.load %arg7[%c0_24, %c0_25, %c0_26] : memref<4x32x96xf32, #tpu.memory_space<vmem>>, vector<1x32x96xf32>
    %28 = vector.shape_cast %27 : vector<1x32x96xf32> to vector<32x96xf32>
    %c0_27 = arith.constant 0 : index
    %c0_28 = arith.constant 0 : index
    %c0_29 = arith.constant 0 : index
    %29 = vector.load %arg8[%c0_27, %c0_28, %c0_29] : memref<4x32x1xf32, #tpu.memory_space<vmem>>, vector<1x32x1xf32>
    %30 = vector.shape_cast %29 : vector<1x32x1xf32> to vector<32x1xf32>
    %31 = vector.extract_strided_slice %26 {offsets = [0, 0], sizes = [32, 40], strides = [1, 1]} : vector<32x42xf32> to vector<32x40xf32>
    %c0_30 = arith.constant 0 : index
    %c0_31 = arith.constant 0 : index
    %32 = vector.load %arg12[%c0_30, %c0_31] : memref<96x40xf32, #tpu.memory_space<vmem>>, vector<32x40xf32>
    tpu.vector_store %arg12[%c0_30, %c0_31], %31 {strides = array<i32>} : memref<96x40xf32, #tpu.memory_space<vmem>>, vector<32x40xf32>,
    %33 = vector.extract_strided_slice %26 {offsets = [0, 1], sizes = [32, 40], strides = [1, 1]} : vector<32x42xf32> to vector<32x40xf32>
    %c32 = arith.constant 32 : index
    %c0_32 = arith.constant 0 : index
    %34 = vector.load %arg12[%c32, %c0_32] : memref<96x40xf32, #tpu.memory_space<vmem>>, vector<32x40xf32>
    tpu.vector_store %arg12[%c32, %c0_32], %33 {strides = array<i32>} : memref<96x40xf32, #tpu.memory_space<vmem>>, vector<32x40xf32>,
    %35 = vector.extract_strided_slice %26 {offsets = [0, 2], sizes = [32, 40], strides = [1, 1]} : vector<32x42xf32> to vector<32x40xf32>
    %c64 = arith.constant 64 : index
    %c0_33 = arith.constant 0 : index
    %36 = vector.load %arg12[%c64, %c0_33] : memref<96x40xf32, #tpu.memory_space<vmem>>, vector<32x40xf32>
    tpu.vector_store %arg12[%c64, %c0_33], %35 {strides = array<i32>} : memref<96x40xf32, #tpu.memory_space<vmem>>, vector<32x40xf32>,
    %c0_34 = arith.constant 0 : index
    %c0_35 = arith.constant 0 : index
    %37 = vector.load %arg12[%c0_34, %c0_35] : memref<96x40xf32, #tpu.memory_space<vmem>>, vector<96x40xf32>
    %cst_36 = arith.constant dense<0.000000e+00> : vector<32x40xf32>
    %38 = tpu.matmul %28, %37, %cst_36 {dimension_numbers = #tpu.dot_dimension_numbers<[1], [0], [0], [1], [0, 0, 1, 1], [], []>} : vector<32x96xf32>, vector<96x40xf32>, vector<32x40xf32> -> vector<32x40xf32>
    %39 = vector.broadcast %30 : vector<32x1xf32> to vector<32x40xf32>
    %40 = arith.addf %38, %39 : vector<32x40xf32>
    %c1 = arith.constant 1 : index
    %c0_37 = arith.constant 0 : index
    %c0_38 = arith.constant 0 : index
    %41 = vector.load %arg5[%c1, %c0_37, %c0_38] : memref<4x32x1xf32, #tpu.memory_space<vmem>>, vector<1x32x1xf32>
    %42 = vector.shape_cast %41 : vector<1x32x1xf32> to vector<32x1xf32>
    %43 = vector.broadcast %42 : vector<32x1xf32> to vector<32x40xf32>
    %44 = arith.mulf %40, %43 : vector<32x40xf32>
    %c1_39 = arith.constant 1 : index
    %c0_40 = arith.constant 0 : index
    %c0_41 = arith.constant 0 : index
    %45 = vector.load %arg6[%c1_39, %c0_40, %c0_41] : memref<4x32x1xf32, #tpu.memory_space<vmem>>, vector<1x32x1xf32>
    %46 = vector.shape_cast %45 : vector<1x32x1xf32> to vector<32x1xf32>
    %47 = vector.broadcast %46 : vector<32x1xf32> to vector<32x40xf32>
    %48 = arith.addf %44, %47 : vector<32x40xf32>
    %cst_42 = arith.constant 0.000000e+00 : f32
    %49 = vector.broadcast %cst_42 : f32 to vector<32x40xf32>
    %50 = arith.maximumf %48, %49 : vector<32x40xf32>
    %cst_43 = arith.constant dense<0.000000e+00> : vector<32x42xf32>
    %51 = tpu.matmul %50, %0, %cst_43 {dimension_numbers = #tpu.dot_dimension_numbers<[1], [0], [0], [1], [0, 0, 1, 1], [], []>} : vector<32x40xf32>, vector<40x42xf32>, vector<32x42xf32> -> vector<32x42xf32>
    %c1_44 = arith.constant 1 : index
    %c0_45 = arith.constant 0 : index
    %c0_46 = arith.constant 0 : index
    %52 = vector.load %arg7[%c1_44, %c0_45, %c0_46] : memref<4x32x96xf32, #tpu.memory_space<vmem>>, vector<1x32x96xf32>
    %53 = vector.shape_cast %52 : vector<1x32x96xf32> to vector<32x96xf32>
    %c1_47 = arith.constant 1 : index
    %c0_48 = arith.constant 0 : index
    %c0_49 = arith.constant 0 : index
    %54 = vector.load %arg8[%c1_47, %c0_48, %c0_49] : memref<4x32x1xf32, #tpu.memory_space<vmem>>, vector<1x32x1xf32>
    %55 = vector.shape_cast %54 : vector<1x32x1xf32> to vector<32x1xf32>
    %56 = vector.extract_strided_slice %51 {offsets = [0, 0], sizes = [32, 40], strides = [1, 1]} : vector<32x42xf32> to vector<32x40xf32>
    %c0_50 = arith.constant 0 : index
    %c0_51 = arith.constant 0 : index
    %57 = vector.load %arg12[%c0_50, %c0_51] : memref<96x40xf32, #tpu.memory_space<vmem>>, vector<32x40xf32>
    tpu.vector_store %arg12[%c0_50, %c0_51], %56 {strides = array<i32>} : memref<96x40xf32, #tpu.memory_space<vmem>>, vector<32x40xf32>,
    %58 = vector.extract_strided_slice %51 {offsets = [0, 1], sizes = [32, 40], strides = [1, 1]} : vector<32x42xf32> to vector<32x40xf32>
    %c32_52 = arith.constant 32 : index
    %c0_53 = arith.constant 0 : index
    %59 = vector.load %arg12[%c32_52, %c0_53] : memref<96x40xf32, #tpu.memory_space<vmem>>, vector<32x40xf32>
    tpu.vector_store %arg12[%c32_52, %c0_53], %58 {strides = array<i32>} : memref<96x40xf32, #tpu.memory_space<vmem>>, vector<32x40xf32>,
    %60 = vector.extract_strided_slice %51 {offsets = [0, 2], sizes = [32, 40], strides = [1, 1]} : vector<32x42xf32> to vector<32x40xf32>
    %c64_54 = arith.constant 64 : index
    %c0_55 = arith.constant 0 : index
    %61 = vector.load %arg12[%c64_54, %c0_55] : memref<96x40xf32, #tpu.memory_space<vmem>>, vector<32x40xf32>
    tpu.vector_store %arg12[%c64_54, %c0_55], %60 {strides = array<i32>} : memref<96x40xf32, #tpu.memory_space<vmem>>, vector<32x40xf32>,
    %c0_56 = arith.constant 0 : index
    %c0_57 = arith.constant 0 : index
    %62 = vector.load %arg12[%c0_56, %c0_57] : memref<96x40xf32, #tpu.memory_space<vmem>>, vector<96x40xf32>
    %cst_58 = arith.constant dense<0.000000e+00> : vector<32x40xf32>
    %63 = tpu.matmul %53, %62, %cst_58 {dimension_numbers = #tpu.dot_dimension_numbers<[1], [0], [0], [1], [0, 0, 1, 1], [], []>} : vector<32x96xf32>, vector<96x40xf32>, vector<32x40xf32> -> vector<32x40xf32>
    %64 = vector.broadcast %55 : vector<32x1xf32> to vector<32x40xf32>
    %65 = arith.addf %63, %64 : vector<32x40xf32>
    %66 = arith.addf %15, %65 : vector<32x40xf32>
    %c2 = arith.constant 2 : index
    %c0_59 = arith.constant 0 : index
    %c0_60 = arith.constant 0 : index
    %67 = vector.load %arg5[%c2, %c0_59, %c0_60] : memref<4x32x1xf32, #tpu.memory_space<vmem>>, vector<1x32x1xf32>
    %68 = vector.shape_cast %67 : vector<1x32x1xf32> to vector<32x1xf32>
    %69 = vector.broadcast %68 : vector<32x1xf32> to vector<32x40xf32>
    %70 = arith.mulf %66, %69 : vector<32x40xf32>
    %c2_61 = arith.constant 2 : index
    %c0_62 = arith.constant 0 : index
    %c0_63 = arith.constant 0 : index
    %71 = vector.load %arg6[%c2_61, %c0_62, %c0_63] : memref<4x32x1xf32, #tpu.memory_space<vmem>>, vector<1x32x1xf32>
    %72 = vector.shape_cast %71 : vector<1x32x1xf32> to vector<32x1xf32>
    %73 = vector.broadcast %72 : vector<32x1xf32> to vector<32x40xf32>
    %74 = arith.addf %70, %73 : vector<32x40xf32>
    %cst_64 = arith.constant 0.000000e+00 : f32
    %75 = vector.broadcast %cst_64 : f32 to vector<32x40xf32>
    %76 = arith.maximumf %74, %75 : vector<32x40xf32>
    %cst_65 = arith.constant dense<0.000000e+00> : vector<32x42xf32>
    %77 = tpu.matmul %76, %0, %cst_65 {dimension_numbers = #tpu.dot_dimension_numbers<[1], [0], [0], [1], [0, 0, 1, 1], [], []>} : vector<32x40xf32>, vector<40x42xf32>, vector<32x42xf32> -> vector<32x42xf32>
    %c2_66 = arith.constant 2 : index
    %c0_67 = arith.constant 0 : index
    %c0_68 = arith.constant 0 : index
    %78 = vector.load %arg7[%c2_66, %c0_67, %c0_68] : memref<4x32x96xf32, #tpu.memory_space<vmem>>, vector<1x32x96xf32>
    %79 = vector.shape_cast %78 : vector<1x32x96xf32> to vector<32x96xf32>
    %c2_69 = arith.constant 2 : index
    %c0_70 = arith.constant 0 : index
    %c0_71 = arith.constant 0 : index
    %80 = vector.load %arg8[%c2_69, %c0_70, %c0_71] : memref<4x32x1xf32, #tpu.memory_space<vmem>>, vector<1x32x1xf32>
    %81 = vector.shape_cast %80 : vector<1x32x1xf32> to vector<32x1xf32>
    %82 = vector.extract_strided_slice %77 {offsets = [0, 0], sizes = [32, 40], strides = [1, 1]} : vector<32x42xf32> to vector<32x40xf32>
    %c0_72 = arith.constant 0 : index
    %c0_73 = arith.constant 0 : index
    %83 = vector.load %arg12[%c0_72, %c0_73] : memref<96x40xf32, #tpu.memory_space<vmem>>, vector<32x40xf32>
    tpu.vector_store %arg12[%c0_72, %c0_73], %82 {strides = array<i32>} : memref<96x40xf32, #tpu.memory_space<vmem>>, vector<32x40xf32>,
    %84 = vector.extract_strided_slice %77 {offsets = [0, 1], sizes = [32, 40], strides = [1, 1]} : vector<32x42xf32> to vector<32x40xf32>
    %c32_74 = arith.constant 32 : index
    %c0_75 = arith.constant 0 : index
    %85 = vector.load %arg12[%c32_74, %c0_75] : memref<96x40xf32, #tpu.memory_space<vmem>>, vector<32x40xf32>
    tpu.vector_store %arg12[%c32_74, %c0_75], %84 {strides = array<i32>} : memref<96x40xf32, #tpu.memory_space<vmem>>, vector<32x40xf32>,
    %86 = vector.extract_strided_slice %77 {offsets = [0, 2], sizes = [32, 40], strides = [1, 1]} : vector<32x42xf32> to vector<32x40xf32>
    %c64_76 = arith.constant 64 : index
    %c0_77 = arith.constant 0 : index
    %87 = vector.load %arg12[%c64_76, %c0_77] : memref<96x40xf32, #tpu.memory_space<vmem>>, vector<32x40xf32>
    tpu.vector_store %arg12[%c64_76, %c0_77], %86 {strides = array<i32>} : memref<96x40xf32, #tpu.memory_space<vmem>>, vector<32x40xf32>,
    %c0_78 = arith.constant 0 : index
    %c0_79 = arith.constant 0 : index
    %88 = vector.load %arg12[%c0_78, %c0_79] : memref<96x40xf32, #tpu.memory_space<vmem>>, vector<96x40xf32>
    %cst_80 = arith.constant dense<0.000000e+00> : vector<32x40xf32>
    %89 = tpu.matmul %79, %88, %cst_80 {dimension_numbers = #tpu.dot_dimension_numbers<[1], [0], [0], [1], [0, 0, 1, 1], [], []>} : vector<32x96xf32>, vector<96x40xf32>, vector<32x40xf32> -> vector<32x40xf32>
    %90 = vector.broadcast %81 : vector<32x1xf32> to vector<32x40xf32>
    %91 = arith.addf %89, %90 : vector<32x40xf32>
    %c3 = arith.constant 3 : index
    %c0_81 = arith.constant 0 : index
    %c0_82 = arith.constant 0 : index
    %92 = vector.load %arg5[%c3, %c0_81, %c0_82] : memref<4x32x1xf32, #tpu.memory_space<vmem>>, vector<1x32x1xf32>
    %93 = vector.shape_cast %92 : vector<1x32x1xf32> to vector<32x1xf32>
    %94 = vector.broadcast %93 : vector<32x1xf32> to vector<32x40xf32>
    %95 = arith.mulf %91, %94 : vector<32x40xf32>
    %c3_83 = arith.constant 3 : index
    %c0_84 = arith.constant 0 : index
    %c0_85 = arith.constant 0 : index
    %96 = vector.load %arg6[%c3_83, %c0_84, %c0_85] : memref<4x32x1xf32, #tpu.memory_space<vmem>>, vector<1x32x1xf32>
    %97 = vector.shape_cast %96 : vector<1x32x1xf32> to vector<32x1xf32>
    %98 = vector.broadcast %97 : vector<32x1xf32> to vector<32x40xf32>
    %99 = arith.addf %95, %98 : vector<32x40xf32>
    %cst_86 = arith.constant 0.000000e+00 : f32
    %100 = vector.broadcast %cst_86 : f32 to vector<32x40xf32>
    %101 = arith.maximumf %99, %100 : vector<32x40xf32>
    %cst_87 = arith.constant dense<0.000000e+00> : vector<32x42xf32>
    %102 = tpu.matmul %101, %0, %cst_87 {dimension_numbers = #tpu.dot_dimension_numbers<[1], [0], [0], [1], [0, 0, 1, 1], [], []>} : vector<32x40xf32>, vector<40x42xf32>, vector<32x42xf32> -> vector<32x42xf32>
    %c3_88 = arith.constant 3 : index
    %c0_89 = arith.constant 0 : index
    %c0_90 = arith.constant 0 : index
    %103 = vector.load %arg7[%c3_88, %c0_89, %c0_90] : memref<4x32x96xf32, #tpu.memory_space<vmem>>, vector<1x32x96xf32>
    %104 = vector.shape_cast %103 : vector<1x32x96xf32> to vector<32x96xf32>
    %c3_91 = arith.constant 3 : index
    %c0_92 = arith.constant 0 : index
    %c0_93 = arith.constant 0 : index
    %105 = vector.load %arg8[%c3_91, %c0_92, %c0_93] : memref<4x32x1xf32, #tpu.memory_space<vmem>>, vector<1x32x1xf32>
    %106 = vector.shape_cast %105 : vector<1x32x1xf32> to vector<32x1xf32>
    %107 = vector.extract_strided_slice %102 {offsets = [0, 0], sizes = [32, 40], strides = [1, 1]} : vector<32x42xf32> to vector<32x40xf32>
    %c0_94 = arith.constant 0 : index
    %c0_95 = arith.constant 0 : index
    %108 = vector.load %arg12[%c0_94, %c0_95] : memref<96x40xf32, #tpu.memory_space<vmem>>, vector<32x40xf32>
    tpu.vector_store %arg12[%c0_94, %c0_95], %107 {strides = array<i32>} : memref<96x40xf32, #tpu.memory_space<vmem>>, vector<32x40xf32>,
    %109 = vector.extract_strided_slice %102 {offsets = [0, 1], sizes = [32, 40], strides = [1, 1]} : vector<32x42xf32> to vector<32x40xf32>
    %c32_96 = arith.constant 32 : index
    %c0_97 = arith.constant 0 : index
    %110 = vector.load %arg12[%c32_96, %c0_97] : memref<96x40xf32, #tpu.memory_space<vmem>>, vector<32x40xf32>
    tpu.vector_store %arg12[%c32_96, %c0_97], %109 {strides = array<i32>} : memref<96x40xf32, #tpu.memory_space<vmem>>, vector<32x40xf32>,
    %111 = vector.extract_strided_slice %102 {offsets = [0, 2], sizes = [32, 40], strides = [1, 1]} : vector<32x42xf32> to vector<32x40xf32>
    %c64_98 = arith.constant 64 : index
    %c0_99 = arith.constant 0 : index
    %112 = vector.load %arg12[%c64_98, %c0_99] : memref<96x40xf32, #tpu.memory_space<vmem>>, vector<32x40xf32>
    tpu.vector_store %arg12[%c64_98, %c0_99], %111 {strides = array<i32>} : memref<96x40xf32, #tpu.memory_space<vmem>>, vector<32x40xf32>,
    %c0_100 = arith.constant 0 : index
    %c0_101 = arith.constant 0 : index
    %113 = vector.load %arg12[%c0_100, %c0_101] : memref<96x40xf32, #tpu.memory_space<vmem>>, vector<96x40xf32>
    %cst_102 = arith.constant dense<0.000000e+00> : vector<32x40xf32>
    %114 = tpu.matmul %104, %113, %cst_102 {dimension_numbers = #tpu.dot_dimension_numbers<[1], [0], [0], [1], [0, 0, 1, 1], [], []>} : vector<32x96xf32>, vector<96x40xf32>, vector<32x40xf32> -> vector<32x40xf32>
    %115 = vector.broadcast %106 : vector<32x1xf32> to vector<32x40xf32>
    %116 = arith.addf %114, %115 : vector<32x40xf32>
    %117 = arith.addf %66, %116 : vector<32x40xf32>
    %cst_103 = arith.constant dense<0.000000e+00> : vector<32x42xf32>
    %118 = tpu.matmul %117, %0, %cst_103 {dimension_numbers = #tpu.dot_dimension_numbers<[1], [0], [0], [1], [0, 0, 1, 1], [], []>} : vector<32x40xf32>, vector<40x42xf32>, vector<32x42xf32> -> vector<32x42xf32>
    %c0_104 = arith.constant 0 : index
    %c0_105 = arith.constant 0 : index
    %119 = vector.load %arg9[%c0_104, %c0_105] : memref<4x96xf32, #tpu.memory_space<vmem>>, vector<4x96xf32>
    %c0_106 = arith.constant 0 : index
    %c0_107 = arith.constant 0 : index
    %120 = vector.load %arg10[%c0_106, %c0_107] : memref<4x1xf32, #tpu.memory_space<vmem>>, vector<4x1xf32>
    %121 = vector.extract_strided_slice %118 {offsets = [0, 0], sizes = [32, 40], strides = [1, 1]} : vector<32x42xf32> to vector<32x40xf32>
    %c0_108 = arith.constant 0 : index
    %c0_109 = arith.constant 0 : index
    %122 = vector.load %arg12[%c0_108, %c0_109] : memref<96x40xf32, #tpu.memory_space<vmem>>, vector<32x40xf32>
    tpu.vector_store %arg12[%c0_108, %c0_109], %121 {strides = array<i32>} : memref<96x40xf32, #tpu.memory_space<vmem>>, vector<32x40xf32>,
    %123 = vector.extract_strided_slice %118 {offsets = [0, 1], sizes = [32, 40], strides = [1, 1]} : vector<32x42xf32> to vector<32x40xf32>
    %c32_110 = arith.constant 32 : index
    %c0_111 = arith.constant 0 : index
    %124 = vector.load %arg12[%c32_110, %c0_111] : memref<96x40xf32, #tpu.memory_space<vmem>>, vector<32x40xf32>
    tpu.vector_store %arg12[%c32_110, %c0_111], %123 {strides = array<i32>} : memref<96x40xf32, #tpu.memory_space<vmem>>, vector<32x40xf32>,
    %125 = vector.extract_strided_slice %118 {offsets = [0, 2], sizes = [32, 40], strides = [1, 1]} : vector<32x42xf32> to vector<32x40xf32>
    %c64_112 = arith.constant 64 : index
    %c0_113 = arith.constant 0 : index
    %126 = vector.load %arg12[%c64_112, %c0_113] : memref<96x40xf32, #tpu.memory_space<vmem>>, vector<32x40xf32>
    tpu.vector_store %arg12[%c64_112, %c0_113], %125 {strides = array<i32>} : memref<96x40xf32, #tpu.memory_space<vmem>>, vector<32x40xf32>,
    %c0_114 = arith.constant 0 : index
    %c0_115 = arith.constant 0 : index
    %127 = vector.load %arg12[%c0_114, %c0_115] : memref<96x40xf32, #tpu.memory_space<vmem>>, vector<96x40xf32>
    %cst_116 = arith.constant dense<0.000000e+00> : vector<4x40xf32>
    %128 = tpu.matmul %119, %127, %cst_116 {dimension_numbers = #tpu.dot_dimension_numbers<[1], [0], [0], [1], [0, 0, 1, 1], [], []>} : vector<4x96xf32>, vector<96x40xf32>, vector<4x40xf32> -> vector<4x40xf32>
    %129 = vector.broadcast %120 : vector<4x1xf32> to vector<4x40xf32>
    %130 = arith.addf %128, %129 : vector<4x40xf32>
    %c0_117 = arith.constant 0 : index
    %c0_118 = arith.constant 0 : index
    %131 = vector.load %arg11[%c0_117, %c0_118] : memref<4x40xf32, #tpu.memory_space<vmem>>, vector<4x40xf32>
    tpu.vector_store %arg11[%c0_117, %c0_118], %130 {strides = array<i32>} : memref<4x40xf32, #tpu.memory_space<vmem>>, vector<4x40xf32>,
    return
  }
}

</mosaic_0001>

<llo_original>
// kernel: conv_residual_net_forward.1
$region0: #{conv_residual_net_forward.1}
  #allocation0 [shape = 'u32[]', space=smem, size = 0x4, offset = 0x4, fixed_abs, tag = 'smem constant byte address 0x4 - core index']
  #allocation1 [shape = 'u32[144,128]{1,0:T(1,128)}', space=vmem, size = 0x12000, scoped, tag = 'internal scratch']
  #allocation2 [shape = 'f32[96,40]{1,0:T(8,128)}', space=vmem, size = 0xc000, scoped, tag = 'scratch operand']
  %s0 = inlined_call_operand.vmem [shape: f32[8,32], index: 0, kind: input, shape index: {}]
  %s1 = inlined_call_operand.vmem [shape: f32[32,42], index: 1, kind: input, shape index: {}]
  %s2 = inlined_call_operand.vmem [shape: f32[40,42], index: 2, kind: input, shape index: {}]
  %s3 = inlined_call_operand.vmem [shape: f32[32,24], index: 3, kind: input, shape index: {}]
  %s4 = inlined_call_operand.vmem [shape: f32[32,1], index: 4, kind: input, shape index: {}]
  %s5 = inlined_call_operand.vmem [shape: f32[4,32,1], index: 5, kind: input, shape index: {}]
  %s6 = inlined_call_operand.vmem [shape: f32[4,32,1], index: 6, kind: input, shape index: {}]
  %s7 = inlined_call_operand.vmem [shape: f32[4,32,96], index: 7, kind: input, shape index: {}]
  %s8 = inlined_call_operand.vmem [shape: f32[4,32,1], index: 8, kind: input, shape index: {}]
  %s9 = inlined_call_operand.vmem [shape: f32[4,96], index: 9, kind: input, shape index: {}]
  %s10 = inlined_call_operand.vmem [shape: f32[4,1], index: 10, kind: input, shape index: {}]
  %s11 = inlined_call_operand.vmem [shape: f32[4,40], index: 11, kind: output, shape index: {}]
  %s12 = sld [smem:[#allocation0]]
  $region54: #{conv_residual_net_forward.1} parent=0
    _
  %s14 = ssub.s32 1, %s12
  %s15 = scalar_select 0, %s14, %s12
  // Predicated region
  $region2: #{conv_residual_net_forward.1} parent=0 // pred_check
    _
  $region3: #{conv_residual_net_forward.1} parent=0 // pred_check_branch
    %17 = sbr.rel (0) target = $region5
  $region4: #{conv_residual_net_forward.1} parent=0 // pred_region
    _
  $region5: #{conv_residual_net_forward.1} parent=0 // pred_fallthru
    _
  // Predicated region
  $region6: #{conv_residual_net_forward.1} parent=0 // pred_check
    _
  $region7: #{conv_residual_net_forward.1} parent=0 // pred_check_branch
    %19 = sbr.rel (0) target = $region9
  $region8: #{conv_residual_net_forward.1} parent=0 // pred_region
    _
  $region9: #{conv_residual_net_forward.1} parent=0 // pred_fallthru
    _
  // Predicated region
  $region10: #{conv_residual_net_forward.1} parent=0 // pred_check
    _
  $region11: #{conv_residual_net_forward.1} parent=0 // pred_check_branch
    %21 = sbr.rel (0) target = $region13
  $region12: #{conv_residual_net_forward.1} parent=0 // pred_region
    _
  $region13: #{conv_residual_net_forward.1} parent=0 // pred_fallthru
    _
  // Predicated region
  $region14: #{conv_residual_net_forward.1} parent=0 // pred_check
    _
  $region15: #{conv_residual_net_forward.1} parent=0 // pred_check_branch
    %23 = sbr.rel (0) target = $region17
  $region16: #{conv_residual_net_forward.1} parent=0 // pred_region
    _
  $region17: #{conv_residual_net_forward.1} parent=0 // pred_fallthru
    _
  // Predicated region
  $region18: #{conv_residual_net_forward.1} parent=0 // pred_check
    _
  $region19: #{conv_residual_net_forward.1} parent=0 // pred_check_branch
    %25 = sbr.rel (0) target = $region21
  $region20: #{conv_residual_net_forward.1} parent=0 // pred_region
    _
  $region21: #{conv_residual_net_forward.1} parent=0 // pred_fallthru
    _
  // Predicated region
  $region22: #{conv_residual_net_forward.1} parent=0 // pred_check
    _
  $region23: #{conv_residual_net_forward.1} parent=0 // pred_check_branch
    %27 = sbr.rel (0) target = $region25
  $region24: #{conv_residual_net_forward.1} parent=0 // pred_region
    _
  $region25: #{conv_residual_net_forward.1} parent=0 // pred_fallthru
    _
  // Predicated region
  $region26: #{conv_residual_net_forward.1} parent=0 // pred_check
    _
  $region27: #{conv_residual_net_forward.1} parent=0 // pred_check_branch
    %29 = sbr.rel (0) target = $region29
  $region28: #{conv_residual_net_forward.1} parent=0 // pred_region
    _
  $region29: #{conv_residual_net_forward.1} parent=0 // pred_fallthru
    _
  // Predicated region
  $region30: #{conv_residual_net_forward.1} parent=0 // pred_check
    _
  $region31: #{conv_residual_net_forward.1} parent=0 // pred_check_branch
    %31 = sbr.rel (0) target = $region33
  $region32: #{conv_residual_net_forward.1} parent=0 // pred_region
    _
  $region33: #{conv_residual_net_forward.1} parent=0 // pred_fallthru
    _
  // Predicated region
  $region34: #{conv_residual_net_forward.1} parent=0 // pred_check
    _
  $region35: #{conv_residual_net_forward.1} parent=0 // pred_check_branch
    %33 = sbr.rel (0) target = $region37
  $region36: #{conv_residual_net_forward.1} parent=0 // pred_region
    _
  $region37: #{conv_residual_net_forward.1} parent=0 // pred_fallthru
    _
  // Predicated region
  $region38: #{conv_residual_net_forward.1} parent=0 // pred_check
    _
  $region39: #{conv_residual_net_forward.1} parent=0 // pred_check_branch
    %35 = sbr.rel (0) target = $region41
  $region40: #{conv_residual_net_forward.1} parent=0 // pred_region
    _
  $region41: #{conv_residual_net_forward.1} parent=0 // pred_fallthru
    _
  // Predicated region
  $region42: #{conv_residual_net_forward.1} parent=0 // pred_check
    _
  $region43: #{conv_residual_net_forward.1} parent=0 // pred_check_branch
    %37 = sbr.rel (0) target = $region45
  $region44: #{conv_residual_net_forward.1} parent=0 // pred_region
    _
  $region45: #{conv_residual_net_forward.1} parent=0 // pred_fallthru
    _
  %v38 = vld [vmem:[%s2] sm:$0xff]
  %v39 = vld [vmem:[%s2 + $0x8] sm:$0xff]
  %v40 = vld [vmem:[%s2 + $0x10] sm:$0xff]
  %v41 = vld [vmem:[%s2 + $0x18] sm:$0xff]
  %v42 = vld [vmem:[%s2 + $0x20] sm:$0xff]
  %v43 = vld [vmem:[%s0] sm:$0xff]
  %v44 = vld [vmem:[%s1] sm:$0xff]
  %v45 = vld [vmem:[%s1 + $0x8] sm:$0xff]
  %v46 = vld [vmem:[%s1 + $0x10] sm:$0xff]
  %v47 = vld [vmem:[%s1 + $0x18] sm:$0xff]
  %vm48 = vcmask 261120
  %v50 = vsel %vm48, %v43, 0
  %52 = vmatprep.subr.mxu0 0.0
  %53 = vmatpush1.msra.mxu0 %v44
  %54 = vmatprep.subr.mxu0 0.0
  %55 = vmatpush1.msra.mxu0 %v45
  %56 = vmatprep.subr.mxu0 0.0
  %57 = vmatpush1.msra.mxu0 %v46
  %58 = vmatprep.subr.mxu0 0.0
  %59 = vmatpush1.msra.mxu0 %v47
  %60 = vmatprep.subr.mxu0 0.0
  %61 = vmatpush1.msra.mxu0 0.0
  %62 = vmatprep.subr.mxu0 0.0
  %63 = vmatpush1.msra.mxu0 0.0
  %64 = vmatprep.subr.mxu0 0.0
  %65 = vmatpush1.msra.mxu0 0.0
  %66 = vmatprep.subr.mxu0 0.0
  %67 = vmatpush1.msra.mxu0 0.0
  %68 = vmatprep.subr.mxu0 0.0
  %69 = vmatpush1.msra.mxu0 0.0
  %70 = vmatprep.subr.mxu0 0.0
  %71 = vmatpush1.msra.mxu0 0.0
  %72 = vmatprep.subr.mxu0 0.0
  %73 = vmatpush1.msra.mxu0 0.0
  %74 = vmatprep.subr.mxu0 0.0
  %75 = vmatpush1.msra.mxu0 0.0
  %76 = vmatprep.subr.mxu0 0.0
  %77 = vmatpush1.msra.mxu0 0.0
  %78 = vmatprep.subr.mxu0 0.0
  %79 = vmatpush1.msra.mxu0 0.0
  %80 = vmatprep.subr.mxu0 0.0
  %81 = vmatpush1.msra.mxu0 0.0
  %82 = vmatprep.subr.mxu0 0.0
  %83 = vmatpush1.msra.mxu0 0.0
  %84 = vmatprep.subr.mxu0 0.0
  %85 = vmatpush1.msra.mxu0 0.0
  %86 = vmatprep.subr.mxu0 0.0
  %87 = vmatpush1.msra.mxu0 0.0
  %88 = vmatprep.subr.mxu0 0.0
  %89 = vmatpush1.msra.mxu0 0.0
  %90 = vmatprep.subr.mxu0 0.0
  %91 = vmatpush1.msra.mxu0 0.0
  %92 = vmatprep.subr.mxu0 0.0
  %93 = vmatpush1.msra.mxu0 0.0
  %94 = vmatprep.subr.mxu0 0.0
  %95 = vmatpush1.msra.mxu0 0.0
  %96 = vmatprep.subr.mxu0 0.0
  %97 = vmatpush1.msra.mxu0 0.0
  %98 = vmatprep.subr.mxu0 0.0
  %99 = vmatpush1.msra.mxu0 0.0
  %100 = vmatprep.subr.mxu0 0.0
  %101 = vmatpush1.msra.mxu0 0.0
  %102 = vmatprep.subr.mxu0 0.0
  %103 = vmatpush1.msra.mxu0 0.0
  %104 = vmatprep.subr.mxu0 0.0
  %105 = vmatpush1.msra.mxu0 0.0
  %106 = vmatprep.subr.mxu0 0.0
  %107 = vmatpush1.msra.mxu0 0.0
  %108 = vmatprep.subr.mxu0 0.0
  %109 = vmatpush1.msra.mxu0 0.0
  %110 = vmatprep.subr.mxu0 0.0
  %111 = vmatpush1.msra.mxu0 0.0
  %112 = vmatprep.subr.mxu0 0.0
  %113 = vmatpush1.msra.mxu0 0.0
  %114 = vmatprep.subr.mxu0 0.0
  %115 = vmatpush1.msra.mxu0 0.0
  %116 = vmatprep.mubr.f32.mxu0 0.0
  %117 = vmatmul.mubr.f32.gmra.mrb[0].mxu0 %v50
  %v118 = vpop.f32.mrb[0].mxu0
  %v119 = vadd.f32 0.0, %v118
  %v120 = vpop.f32.mrb[0].mxu0
  %121 = vdwg.mxu0
  %v122 = vld [vmem:[%s3] sm:$0xff]
  %v123 = vld [vmem:[%s3 + $0x8] sm:$0xff]
  %v124 = vld [vmem:[%s3 + $0x10] sm:$0xff]
  %v125 = vld [vmem:[%s3 + $0x18] sm:$0xff]
  %v126 = vld [vmem:[%s4] sm:$0xff]
  %v127 = vld [vmem:[%s4 + $0x8] sm:$0xff]
  %v128 = vld [vmem:[%s4 + $0x10] sm:$0xff]
  %v129 = vld [vmem:[%s4 + $0x18] sm:$0xff]
  %vm130 = vcmask 326656
  %131 = vst.msk [vmem:[#allocation2] sm:$0xff] %vm130, %v119
  %133 = vrot.lane.b32.xlu0 %v119, 127
  %v134 = vpop.permute.xlu0 %133
  %136 = vst.msk [vmem:[#allocation2 + $0x8] sm:$0xff] %vm130, %v134
  %137 = vrot.lane.b32.xlu0 %v119, 126
  %v138 = vpop.permute.xlu0 %137
  %140 = vst.msk [vmem:[#allocation2 + $0x10] sm:$0xff] %vm130, %v138
  %v141 = vld [vmem:[#allocation2] sm:$0xff]
  %v142 = vld [vmem:[#allocation2 + $0x8] sm:$0xff]
  %v143 = vld [vmem:[#allocation2 + $0x10] sm:$0xff]
  %145 = vset.pattern.permute.xlu0 0
  %146 = vperm.xlu0 %145, %v126
  %v147 = vpop.permute.xlu0 %146
  %150 = vset.pattern.permute.xlu0 0
  %151 = vperm.xlu0 %150, %v127
  %v152 = vpop.permute.xlu0 %151
  %155 = vset.pattern.permute.xlu0 0
  %156 = vperm.xlu0 %155, %v128
  %v157 = vpop.permute.xlu0 %156
  %160 = vset.pattern.permute.xlu0 0
  %161 = vperm.xlu0 %160, %v129
  %v162 = vpop.permute.xlu0 %161
  %vm164 = vcmask 195584
  %v166 = vsel %vm164, %v122, 0
  %v169 = vsel %vm164, %v123, 0
  %v172 = vsel %vm164, %v124, 0
  %v175 = vsel %vm164, %v125, 0
  %177 = vmatprep.subr.mxu0 0.0
  %178 = vmatpush1.msra.mxu0 %v141
  %179 = vmatprep.subr.mxu0 0.0
  %180 = vmatpush1.msra.mxu0 %v142
  %181 = vmatprep.subr.mxu0 0.0
  %182 = vmatpush1.msra.mxu0 %v143
  %183 = vmatprep.subr.mxu0 0.0
  %184 = vmatpush1.msra.mxu0 0.0
  %185 = vmatprep.subr.mxu0 0.0
  %186 = vmatpush1.msra.mxu0 0.0
  %187 = vmatprep.subr.mxu0 0.0
  %188 = vmatpush1.msra.mxu0 0.0
  %189 = vmatprep.subr.mxu0 0.0
  %190 = vmatpush1.msra.mxu0 0.0
  %191 = vmatprep.subr.mxu0 0.0
  %192 = vmatpush1.msra.mxu0 0.0
  %193 = vmatprep.subr.mxu0 0.0
  %194 = vmatpush1.msra.mxu0 0.0
  %195 = vmatprep.subr.mxu0 0.0
  %196 = vmatpush1.msra.mxu0 0.0
  %197 = vmatprep.subr.mxu0 0.0
  %198 = vmatpush1.msra.mxu0 0.0
  %199 = vmatprep.subr.mxu0 0.0
  %200 = vmatpush1.msra.mxu0 0.0
  %201 = vmatprep.subr.mxu0 0.0
  %202 = vmatpush1.msra.mxu0 0.0
  %203 = vmatprep.subr.mxu0 0.0
  %204 = vmatpush1.msra.mxu0 0.0
  %205 = vmatprep.subr.mxu0 0.0
  %206 = vmatpush1.msra.mxu0 0.0
  %207 = vmatprep.subr.mxu0 0.0
  %208 = vmatpush1.msra.mxu0 0.0
  %209 = vmatprep.subr.mxu0 0.0
  %210 = vmatpush1.msra.mxu0 0.0
  %211 = vmatprep.subr.mxu0 0.0
  %212 = vmatpush1.msra.mxu0 0.0
  %213 = vmatprep.subr.mxu0 0.0
  %214 = vmatpush1.msra.mxu0 0.0
  %215 = vmatprep.subr.mxu0 0.0
  %216 = vmatpush1.msra.mxu0 0.0
  %217 = vmatprep.subr.mxu0 0.0
  %218 = vmatpush1.msra.mxu0 0.0
  %219 = vmatprep.subr.mxu0 0.0
  %220 = vmatpush1.msra.mxu0 0.0
  %221 = vmatprep.subr.mxu0 0.0
  %222 = vmatpush1.msra.mxu0 0.0
  %223 = vmatprep.subr.mxu0 0.0
  %224 = vmatpush1.msra.mxu0 0.0
  %225 = vmatprep.subr.mxu0 0.0
  %226 = vmatpush1.msra.mxu0 0.0
  %227 = vmatprep.subr.mxu0 0.0
  %228 = vmatpush1.msra.mxu0 0.0
  %229 = vmatprep.subr.mxu0 0.0
  %230 = vmatpush1.msra.mxu0 0.0
  %231 = vmatprep.subr.mxu0 0.0
  %232 = vmatpush1.msra.mxu0 0.0
  %233 = vmatprep.subr.mxu0 0.0
  %234 = vmatpush1.msra.mxu0 0.0
  %235 = vmatprep.subr.mxu0 0.0
  %236 = vmatpush1.msra.mxu0 0.0
  %237 = vmatprep.subr.mxu0 0.0
  %238 = vmatpush1.msra.mxu0 0.0
  %239 = vmatprep.subr.mxu0 0.0
  %240 = vmatpush1.msra.mxu0 0.0
  %241 = vmatprep.mubr.f32.mxu0 0.0
  %242 = vmatmul.mubr.f32.gmra.mrb[0].mxu0 %v166
  %v243 = vpop.f32.mrb[0].mxu0
  %v244 = vadd.f32 %v147, %v243
  %v245 = vpop.f32.mrb[0].mxu0
  %246 = vmatprep.mubr.f32.mxu0 0.0
  %247 = vmatmul.mubr.f32.gmra.mrb[0].mxu0 %v169
  %v248 = vpop.f32.mrb[0].mxu0
  %v249 = vadd.f32 %v152, %v248
  %v250 = vpop.f32.mrb[0].mxu0
  %251 = vmatprep.mubr.f32.mxu0 0.0
  %252 = vmatmul.mubr.f32.gmra.mrb[0].mxu0 %v172
  %v253 = vpop.f32.mrb[0].mxu0
  %v254 = vadd.f32 %v157, %v253
  %v255 = vpop.f32.mrb[0].mxu0
  %256 = vmatprep.mubr.f32.mxu0 0.0
  %257 = vmatmul.mubr.f32.gmra.mrb[0].mxu0 %v175
  %v258 = vpop.f32.mrb[0].mxu0
  %v259 = vadd.f32 %v162, %v258
  %v260 = vpop.f32.mrb[0].mxu0
  %261 = vdwg.mxu0
  %v262 = vld [vmem:[%s5] sm:$0xff]
  %v263 = vld [vmem:[%s5 + $0x8] sm:$0xff]
  %v264 = vld [vmem:[%s5 + $0x10] sm:$0xff]
  %v265 = vld [vmem:[%s5 + $0x18] sm:$0xff]
  %267 = vset.pattern.permute.xlu0 0
  %268 = vperm.xlu0 %267, %v262
  %v269 = vpop.permute.xlu0 %268
  %272 = vset.pattern.permute.xlu0 0
  %273 = vperm.xlu0 %272, %v263
  %v274 = vpop.permute.xlu0 %273
  %277 = vset.pattern.permute.xlu0 0
  %278 = vperm.xlu0 %277, %v264
  %v279 = vpop.permute.xlu0 %278
  %282 = vset.pattern.permute.xlu0 0
  %283 = vperm.xlu0 %282, %v265
  %v284 = vpop.permute.xlu0 %283
  %v286 = vmul.f32 %v244, %v269
  %v287 = vmul.f32 %v249, %v274
  %v288 = vmul.f32 %v254, %v279
  %v289 = vmul.f32 %v259, %v284
  %v290 = vld [vmem:[%s6] sm:$0xff]
  %v291 = vld [vmem:[%s6 + $0x8] sm:$0xff]
  %v292 = vld [vmem:[%s6 + $0x10] sm:$0xff]
  %v293 = vld [vmem:[%s6 + $0x18] sm:$0xff]
  %295 = vset.pattern.permute.xlu0 0
  %296 = vperm.xlu0 %295, %v290
  %v297 = vpop.permute.xlu0 %296
  %300 = vset.pattern.permute.xlu0 0
  %301 = vperm.xlu0 %300, %v291
  %v302 = vpop.permute.xlu0 %301
  %305 = vset.pattern.permute.xlu0 0
  %306 = vperm.xlu0 %305, %v292
  %v307 = vpop.permute.xlu0 %306
  %310 = vset.pattern.permute.xlu0 0
  %311 = vperm.xlu0 %310, %v293
  %v312 = vpop.permute.xlu0 %311
  %v314 = vadd.f32 %v286, %v297
  %v315 = vadd.f32 %v287, %v302
  %v316 = vadd.f32 %v288, %v307
  %v317 = vadd.f32 %v289, %v312
  %v318 = vmax.f32 %v314, 0.0
  %v319 = vmax.f32 %v315, 0.0
  %v320 = vmax.f32 %v316, 0.0
  %v321 = vmax.f32 %v317, 0.0
  %v323 = vsel %vm130, %v318, 0
  %v326 = vsel %vm130, %v319, 0
  %v329 = vsel %vm130, %v320, 0
  %v332 = vsel %vm130, %v321, 0
  %334 = vmatprep.subr.mxu0 0.0
  %335 = vmatpush1.msra.mxu0 %v38
  %336 = vmatprep.subr.mxu0 0.0
  %337 = vmatpush1.msra.mxu0 %v39
  %338 = vmatprep.subr.mxu0 0.0
  %339 = vmatpush1.msra.mxu0 %v40
  %340 = vmatprep.subr.mxu0 0.0
  %341 = vmatpush1.msra.mxu0 %v41
  %342 = vmatprep.subr.mxu0 0.0
  %343 = vmatpush1.msra.mxu0 %v42
  %344 = vmatprep.subr.mxu0 0.0
  %345 = vmatpush1.msra.mxu0 0.0
  %346 = vmatprep.subr.mxu0 0.0
  %347 = vmatpush1.msra.mxu0 0.0
  %348 = vmatprep.subr.mxu0 0.0
  %349 = vmatpush1.msra.mxu0 0.0
  %350 = vmatprep.subr.mxu0 0.0
  %351 = vmatpush1.msra.mxu0 0.0
  %352 = vmatprep.subr.mxu0 0.0
  %353 = vmatpush1.msra.mxu0 0.0
  %354 = vmatprep.subr.mxu0 0.0
  %355 = vmatpush1.msra.mxu0 0.0
  %356 = vmatprep.subr.mxu0 0.0
  %357 = vmatpush1.msra.mxu0 0.0
  %358 = vmatprep.subr.mxu0 0.0
  %359 = vmatpush1.msra.mxu0 0.0
  %360 = vmatprep.subr.mxu0 0.0
  %361 = vmatpush1.msra.mxu0 0.0
  %362 = vmatprep.subr.mxu0 0.0
  %363 = vmatpush1.msra.mxu0 0.0
  %364 = vmatprep.subr.mxu0 0.0
  %365 = vmatpush1.msra.mxu0 0.0
  %366 = vmatprep.subr.mxu0 0.0
  %367 = vmatpush1.msra.mxu0 0.0
  %368 = vmatprep.subr.mxu0 0.0
  %369 = vmatpush1.msra.mxu0 0.0
  %370 = vmatprep.subr.mxu0 0.0
  %371 = vmatpush1.msra.mxu0 0.0
  %372 = vmatprep.subr.mxu0 0.0
  %373 = vmatpush1.msra.mxu0 0.0
  %374 = vmatprep.subr.mxu0 0.0
  %375 = vmatpush1.msra.mxu0 0.0
  %376 = vmatprep.subr.mxu0 0.0
  %377 = vmatpush1.msra.mxu0 0.0
  %378 = vmatprep.subr.mxu0 0.0
  %379 = vmatpush1.msra.mxu0 0.0
  %380 = vmatprep.subr.mxu0 0.0
  %381 = vmatpush1.msra.mxu0 0.0
  %382 = vmatprep.subr.mxu0 0.0
  %383 = vmatpush1.msra.mxu0 0.0
  %384 = vmatprep.subr.mxu0 0.0
  %385 = vmatpush1.msra.mxu0 0.0
  %386 = vmatprep.subr.mxu0 0.0
  %387 = vmatpush1.msra.mxu0 0.0
  %388 = vmatprep.subr.mxu0 0.0
  %389 = vmatpush1.msra.mxu0 0.0
  %390 = vmatprep.subr.mxu0 0.0
  %391 = vmatpush1.msra.mxu0 0.0
  %392 = vmatprep.subr.mxu0 0.0
  %393 = vmatpush1.msra.mxu0 0.0
  %394 = vmatprep.subr.mxu0 0.0
  %395 = vmatpush1.msra.mxu0 0.0
  %396 = vmatprep.subr.mxu0 0.0
  %397 = vmatpush1.msra.mxu0 0.0
  %398 = vmatprep.mubr.f32.mxu0 0.0
  %399 = vmatmul.mubr.f32.gmra.mrb[0].mxu0 %v323
  %v400 = vpop.f32.mrb[0].mxu0
  %v401 = vadd.f32 0.0, %v400
  %v402 = vpop.f32.mrb[0].mxu0
  %403 = vmatprep.mubr.f32.mxu0 0.0
  %404 = vmatmul.mubr.f32.gmra.mrb[0].mxu0 %v326
  %v405 = vpop.f32.mrb[0].mxu0
  %v406 = vadd.f32 0.0, %v405
  %v407 = vpop.f32.mrb[0].mxu0
  %408 = vmatprep.mubr.f32.mxu0 0.0
  %409 = vmatmul.mubr.f32.gmra.mrb[0].mxu0 %v329
  %v410 = vpop.f32.mrb[0].mxu0
  %v411 = vadd.f32 0.0, %v410
  %v412 = vpop.f32.mrb[0].mxu0
  %413 = vmatprep.mubr.f32.mxu0 0.0
  %414 = vmatmul.mubr.f32.gmra.mrb[0].mxu0 %v332
  %v415 = vpop.f32.mrb[0].mxu0
  %v416 = vadd.f32 0.0, %v415
  %v417 = vpop.f32.mrb[0].mxu0
  %418 = vdwg.mxu0
  %v419 = vld [vmem:[%s7] sm:$0xff]
  %v420 = vld [vmem:[%s7 + $0x8] sm:$0xff]
  %v421 = vld [vmem:[%s7 + $0x10] sm:$0xff]
  %v422 = vld [vmem:[%s7 + $0x18] sm:$0xff]
  %v423 = vld [vmem:[%s8] sm:$0xff]
  %v424 = vld [vmem:[%s8 + $0x8] sm:$0xff]
  %v425 = vld [vmem:[%s8 + $0x10] sm:$0xff]
  %v426 = vld [vmem:[%s8 + $0x18] sm:$0xff]
  %427 = vst.msk [vmem:[#allocation2] sm:$0xff] %vm130, %v401
  %428 = vst.msk [vmem:[#allocation2 + $0x8] sm:$0xff] %vm130, %v406
  %429 = vst.msk [vmem:[#allocation2 + $0x10] sm:$0xff] %vm130, %v411
  %430 = vst.msk [vmem:[#allocation2 + $0x18] sm:$0xff] %vm130, %v416
  %435 = vrot.lane.b32.xlu0 %v401, 127
  %v436 = vpop.permute.xlu0 %435
  %437 = vrot.lane.b32.xlu0 %v406, 127
  %v438 = vpop.permute.xlu0 %437
  %439 = vrot.lane.b32.xlu0 %v411, 127
  %v440 = vpop.permute.xlu0 %439
  %441 = vrot.lane.b32.xlu0 %v416, 127
  %v442 = vpop.permute.xlu0 %441
  %447 = vst.msk [vmem:[#allocation2 + $0x20] sm:$0xff] %vm130, %v436
  %448 = vst.msk [vmem:[#allocation2 + $0x28] sm:$0xff] %vm130, %v438
  %449 = vst.msk [vmem:[#allocation2 + $0x30] sm:$0xff] %vm130, %v440
  %450 = vst.msk [vmem:[#allocation2 + $0x38] sm:$0xff] %vm130, %v442
  %451 = vrot.lane.b32.xlu0 %v401, 126
  %v452 = vpop.permute.xlu0 %451
  %453 = vrot.lane.b32.xlu0 %v406, 126
  %v454 = vpop.permute.xlu0 %453
  %455 = vrot.lane.b32.xlu0 %v411, 126
  %v456 = vpop.permute.xlu0 %455
  %457 = vrot.lane.b32.xlu0 %v416, 126
  %v458 = vpop.permute.xlu0 %457
  %463 = vst.msk [vmem:[#allocation2 + $0x40] sm:$0xff] %vm130, %v452
  %464 = vst.msk [vmem:[#allocation2 + $0x48] sm:$0xff] %vm130, %v454
  %465 = vst.msk [vmem:[#allocation2 + $0x50] sm:$0xff] %vm130, %v456
  %466 = vst.msk [vmem:[#allocation2 + $0x58] sm:$0xff] %vm130, %v458
  %v467 = vld [vmem:[#allocation2] sm:$0xff]
  %v468 = vld [vmem:[#allocation2 + $0x8] sm:$0xff]
  %v469 = vld [vmem:[#allocation2 + $0x10] sm:$0xff]
  %v470 = vld [vmem:[#allocation2 + $0x18] sm:$0xff]
  %v471 = vld [vmem:[#allocation2 + $0x20] sm:$0xff]
  %v472 = vld [vmem:[#allocation2 + $0x28] sm:$0xff]
  %v473 = vld [vmem:[#allocation2 + $0x30] sm:$0xff]
  %v474 = vld [vmem:[#allocation2 + $0x38] sm:$0xff]
  %v475 = vld [vmem:[#allocation2 + $0x40] sm:$0xff]
  %v476 = vld [vmem:[#allocation2 + $0x48] sm:$0xff]
  %v477 = vld [vmem:[#allocation2 + $0x50] sm:$0xff]
  %v478 = vld [vmem:[#allocation2 + $0x58] sm:$0xff]
  %480 = vset.pattern.permute.xlu0 0
  %481 = vperm.xlu0 %480, %v423
  %v482 = vpop.permute.xlu0 %481
  %485 = vset.pattern.permute.xlu0 0
  %486 = vperm.xlu0 %485, %v424
  %v487 = vpop.permute.xlu0 %486
  %490 = vset.pattern.permute.xlu0 0
  %491 = vperm.xlu0 %490, %v425
  %v492 = vpop.permute.xlu0 %491
  %495 = vset.pattern.permute.xlu0 0
  %496 = vperm.xlu0 %495, %v426
  %v497 = vpop.permute.xlu0 %496
  %vm499 = vcmask 785408
  %v501 = vsel %vm499, %v419, 0
  %v504 = vsel %vm499, %v420, 0
  %v507 = vsel %vm499, %v421, 0
  %v510 = vsel %vm499, %v422, 0
  %512 = vmatprep.subr.mxu0 0.0
  %513 = vmatpush1.msra.mxu0 %v467
  %514 = vmatprep.subr.mxu0 0.0
  %515 = vmatpush1.msra.mxu0 %v468
  %516 = vmatprep.subr.mxu0 0.0
  %517 = vmatpush1.msra.mxu0 %v469
  %518 = vmatprep.subr.mxu0 0.0
  %519 = vmatpush1.msra.mxu0 %v470
  %520 = vmatprep.subr.mxu0 0.0
  %521 = vmatpush1.msra.mxu0 %v471
  %522 = vmatprep.subr.mxu0 0.0
  %523 = vmatpush1.msra.mxu0 %v472
  %524 = vmatprep.subr.mxu0 0.0
  %525 = vmatpush1.msra.mxu0 %v473
  %526 = vmatprep.subr.mxu0 0.0
  %527 = vmatpush1.msra.mxu0 %v474
  %528 = vmatprep.subr.mxu0 0.0
  %529 = vmatpush1.msra.mxu0 %v475
  %530 = vmatprep.subr.mxu0 0.0
  %531 = vmatpush1.msra.mxu0 %v476
  %532 = vmatprep.subr.mxu0 0.0
  %533 = vmatpush1.msra.mxu0 %v477
  %534 = vmatprep.subr.mxu0 0.0
  %535 = vmatpush1.msra.mxu0 %v478
  %536 = vmatprep.subr.mxu0 0.0
  %537 = vmatpush1.msra.mxu0 0.0
  %538 = vmatprep.subr.mxu0 0.0
  %539 = vmatpush1.msra.mxu0 0.0
  %540 = vmatprep.subr.mxu0 0.0
  %541 = vmatpush1.msra.mxu0 0.0
  %542 = vmatprep.subr.mxu0 0.0
  %543 = vmatpush1.msra.mxu0 0.0
  %544 = vmatprep.subr.mxu0 0.0
  %545 = vmatpush1.msra.mxu0 0.0
  %546 = vmatprep.subr.mxu0 0.0
  %547 = vmatpush1.msra.mxu0 0.0
  %548 = vmatprep.subr.mxu0 0.0
  %549 = vmatpush1.msra.mxu0 0.0
  %550 = vmatprep.subr.mxu0 0.0
  %551 = vmatpush1.msra.mxu0 0.0
  %552 = vmatprep.subr.mxu0 0.0
  %553 = vmatpush1.msra.mxu0 0.0
  %554 = vmatprep.subr.mxu0 0.0
  %555 = vmatpush1.msra.mxu0 0.0
  %556 = vmatprep.subr.mxu0 0.0
  %557 = vmatpush1.msra.mxu0 0.0
  %558 = vmatprep.subr.mxu0 0.0
  %559 = vmatpush1.msra.mxu0 0.0
  %560 = vmatprep.subr.mxu0 0.0
  %561 = vmatpush1.msra.mxu0 0.0
  %562 = vmatprep.subr.mxu0 0.0
  %563 = vmatpush1.msra.mxu0 0.0
  %564 = vmatprep.subr.mxu0 0.0
  %565 = vmatpush1.msra.mxu0 0.0
  %566 = vmatprep.subr.mxu0 0.0
  %567 = vmatpush1.msra.mxu0 0.0
  %568 = vmatprep.subr.mxu0 0.0
  %569 = vmatpush1.msra.mxu0 0.0
  %570 = vmatprep.subr.mxu0 0.0
  %571 = vmatpush1.msra.mxu0 0.0
  %572 = vmatprep.subr.mxu0 0.0
  %573 = vmatpush1.msra.mxu0 0.0
  %574 = vmatprep.subr.mxu0 0.0
  %575 = vmatpush1.msra.mxu0 0.0
  %576 = vmatprep.mubr.f32.mxu0 0.0
  %577 = vmatmul.mubr.f32.gmra.mrb[0].mxu0 %v501
  %v578 = vpop.f32.mrb[0].mxu0
  %v579 = vadd.f32 %v482, %v578
  %v580 = vpop.f32.mrb[0].mxu0
  %581 = vmatprep.mubr.f32.mxu0 0.0
  %582 = vmatmul.mubr.f32.gmra.mrb[0].mxu0 %v504
  %v583 = vpop.f32.mrb[0].mxu0
  %v584 = vadd.f32 %v487, %v583
  %v585 = vpop.f32.mrb[0].mxu0
  %586 = vmatprep.mubr.f32.mxu0 0.0
  %587 = vmatmul.mubr.f32.gmra.mrb[0].mxu0 %v507
  %v588 = vpop.f32.mrb[0].mxu0
  %v589 = vadd.f32 %v492, %v588
  %v590 = vpop.f32.mrb[0].mxu0
  %591 = vmatprep.mubr.f32.mxu0 0.0
  %592 = vmatmul.mubr.f32.gmra.mrb[0].mxu0 %v510
  %v593 = vpop.f32.mrb[0].mxu0
  %v594 = vadd.f32 %v497, %v593
  %v595 = vpop.f32.mrb[0].mxu0
  %596 = vdwg.mxu0
  %s597 = scalar_lea.vmem %s5, 32
  %v598 = vld [vmem:[%s597] sm:$0xff]
  %v599 = vld [vmem:[%s597 + $0x8] sm:$0xff]
  %v600 = vld [vmem:[%s597 + $0x10] sm:$0xff]
  %v601 = vld [vmem:[%s597 + $0x18] sm:$0xff]
  %603 = vset.pattern.permute.xlu0 0
  %604 = vperm.xlu0 %603, %v598
  %v605 = vpop.permute.xlu0 %604
  %608 = vset.pattern.permute.xlu0 0
  %609 = vperm.xlu0 %608, %v599
  %v610 = vpop.permute.xlu0 %609
  %613 = vset.pattern.permute.xlu0 0
  %614 = vperm.xlu0 %613, %v600
  %v615 = vpop.permute.xlu0 %614
  %618 = vset.pattern.permute.xlu0 0
  %619 = vperm.xlu0 %618, %v601
  %v620 = vpop.permute.xlu0 %619
  %v622 = vmul.f32 %v579, %v605
  %v623 = vmul.f32 %v584, %v610
  %v624 = vmul.f32 %v589, %v615
  %v625 = vmul.f32 %v594, %v620
  %s626 = scalar_lea.vmem %s6, 32
  %v627 = vld [vmem:[%s626] sm:$0xff]
  %v628 = vld [vmem:[%s626 + $0x8] sm:$0xff]
  %v629 = vld [vmem:[%s626 + $0x10] sm:$0xff]
  %v630 = vld [vmem:[%s626 + $0x18] sm:$0xff]
  %632 = vset.pattern.permute.xlu0 0
  %633 = vperm.xlu0 %632, %v627
  %v634 = vpop.permute.xlu0 %633
  %637 = vset.pattern.permute.xlu0 0
  %638 = vperm.xlu0 %637, %v628
  %v639 = vpop.permute.xlu0 %638
  %642 = vset.pattern.permute.xlu0 0
  %643 = vperm.xlu0 %642, %v629
  %v644 = vpop.permute.xlu0 %643
  %647 = vset.pattern.permute.xlu0 0
  %648 = vperm.xlu0 %647, %v630
  %v649 = vpop.permute.xlu0 %648
  %v651 = vadd.f32 %v622, %v634
  %v652 = vadd.f32 %v623, %v639
  %v653 = vadd.f32 %v624, %v644
  %v654 = vadd.f32 %v625, %v649
  %v655 = vmax.f32 %v651, 0.0
  %v656 = vmax.f32 %v652, 0.0
  %v657 = vmax.f32 %v653, 0.0
  %v658 = vmax.f32 %v654, 0.0
  %v660 = vsel %vm130, %v655, 0
  %v663 = vsel %vm130, %v656, 0
  %v666 = vsel %vm130, %v657, 0
  %v669 = vsel %vm130, %v658, 0
  %671 = vmatprep.subr.mxu0 0.0
  %672 = vmatpush1.msra.mxu0 %v38
  %673 = vmatprep.subr.mxu0 0.0
  %674 = vmatpush1.msra.mxu0 %v39
  %675 = vmatprep.subr.mxu0 0.0
  %676 = vmatpush1.msra.mxu0 %v40
  %677 = vmatprep.subr.mxu0 0.0
  %678 = vmatpush1.msra.mxu0 %v41
  %679 = vmatprep.subr.mxu0 0.0
  %680 = vmatpush1.msra.mxu0 %v42
  %681 = vmatprep.subr.mxu0 0.0
  %682 = vmatpush1.msra.mxu0 0.0
  %683 = vmatprep.subr.mxu0 0.0
  %684 = vmatpush1.msra.mxu0 0.0
  %685 = vmatprep.subr.mxu0 0.0
  %686 = vmatpush1.msra.mxu0 0.0
  %687 = vmatprep.subr.mxu0 0.0
  %688 = vmatpush1.msra.mxu0 0.0
  %689 = vmatprep.subr.mxu0 0.0
  %690 = vmatpush1.msra.mxu0 0.0
  %691 = vmatprep.subr.mxu0 0.0
  %692 = vmatpush1.msra.mxu0 0.0
  %693 = vmatprep.subr.mxu0 0.0
  %694 = vmatpush1.msra.mxu0 0.0
  %695 = vmatprep.subr.mxu0 0.0
  %696 = vmatpush1.msra.mxu0 0.0
  %697 = vmatprep.subr.mxu0 0.0
  %698 = vmatpush1.msra.mxu0 0.0
  %699 = vmatprep.subr.mxu0 0.0
  %700 = vmatpush1.msra.mxu0 0.0
  %701 = vmatprep.subr.mxu0 0.0
  %702 = vmatpush1.msra.mxu0 0.0
  %703 = vmatprep.subr.mxu0 0.0
  %704 = vmatpush1.msra.mxu0 0.0
  %705 = vmatprep.subr.mxu0 0.0
  %706 = vmatpush1.msra.mxu0 0.0
  %707 = vmatprep.subr.mxu0 0.0
  %708 = vmatpush1.msra.mxu0 0.0
  %709 = vmatprep.subr.mxu0 0.0
  %710 = vmatpush1.msra.mxu0 0.0
  %711 = vmatprep.subr.mxu0 0.0
  %712 = vmatpush1.msra.mxu0 0.0
  %713 = vmatprep.subr.mxu0 0.0
  %714 = vmatpush1.msra.mxu0 0.0
  %715 = vmatprep.subr.mxu0 0.0
  %716 = vmatpush1.msra.mxu0 0.0
  %717 = vmatprep.subr.mxu0 0.0
  %718 = vmatpush1.msra.mxu0 0.0
  %719 = vmatprep.subr.mxu0 0.0
  %720 = vmatpush1.msra.mxu0 0.0
  %721 = vmatprep.subr.mxu0 0.0
  %722 = vmatpush1.msra.mxu0 0.0
  %723 = vmatprep.subr.mxu0 0.0
  %724 = vmatpush1.msra.mxu0 0.0
  %725 = vmatprep.subr.mxu0 0.0
  %726 = vmatpush1.msra.mxu0 0.0
  %727 = vmatprep.subr.mxu0 0.0
  %728 = vmatpush1.msra.mxu0 0.0
  %729 = vmatprep.subr.mxu0 0.0
  %730 = vmatpush1.msra.mxu0 0.0
  %731 = vmatprep.subr.mxu0 0.0
  %732 = vmatpush1.msra.mxu0 0.0
  %733 = vmatprep.subr.mxu0 0.0
  %734 = vmatpush1.msra.mxu0 0.0
  %735 = vmatprep.mubr.f32.mxu0 0.0
  %736 = vmatmul.mubr.f32.gmra.mrb[0].mxu0 %v660
  %v737 = vpop.f32.mrb[0].mxu0
  %v738 = vadd.f32 0.0, %v737
  %v739 = vpop.f32.mrb[0].mxu0
  %740 = vmatprep.mubr.f32.mxu0 0.0
  %741 = vmatmul.mubr.f32.gmra.mrb[0].mxu0 %v663
  %v742 = vpop.f32.mrb[0].mxu0
  %v743 = vadd.f32 0.0, %v742
  %v744 = vpop.f32.mrb[0].mxu0
  %745 = vmatprep.mubr.f32.mxu0 0.0
  %746 = vmatmul.mubr.f32.gmra.mrb[0].mxu0 %v666
  %v747 = vpop.f32.mrb[0].mxu0
  %v748 = vadd.f32 0.0, %v747
  %v749 = vpop.f32.mrb[0].mxu0
  %750 = vmatprep.mubr.f32.mxu0 0.0
  %751 = vmatmul.mubr.f32.gmra.mrb[0].mxu0 %v669
  %v752 = vpop.f32.mrb[0].mxu0
  %v753 = vadd.f32 0.0, %v752
  %v754 = vpop.f32.mrb[0].mxu0
  %755 = vdwg.mxu0
  %s756 = scalar_lea.vmem %s7, 32
  %v757 = vld [vmem:[%s756] sm:$0xff]
  %v758 = vld [vmem:[%s756 + $0x8] sm:$0xff]
  %v759 = vld [vmem:[%s756 + $0x10] sm:$0xff]
  %v760 = vld [vmem:[%s756 + $0x18] sm:$0xff]
  %s761 = scalar_lea.vmem %s8, 32
  %v762 = vld [vmem:[%s761] sm:$0xff]
  %v763 = vld [vmem:[%s761 + $0x8] sm:$0xff]
  %v764 = vld [vmem:[%s761 + $0x10] sm:$0xff]
  %v765 = vld [vmem:[%s761 + $0x18] sm:$0xff]
  %766 = vst.msk [vmem:[#allocation2] sm:$0xff] %vm130, %v738
  %767 = vst.msk [vmem:[#allocation2 + $0x8] sm:$0xff] %vm130, %v743
  %768 = vst.msk [vmem:[#allocation2 + $0x10] sm:$0xff] %vm130, %v748
  %769 = vst.msk [vmem:[#allocation2 + $0x18] sm:$0xff] %vm130, %v753
  %774 = vrot.lane.b32.xlu0 %v738, 127
  %v775 = vpop.permute.xlu0 %774
  %776 = vrot.lane.b32.xlu0 %v743, 127
  %v777 = vpop.permute.xlu0 %776
  %778 = vrot.lane.b32.xlu0 %v748, 127
  %v779 = vpop.permute.xlu0 %778
  %780 = vrot.lane.b32.xlu0 %v753, 127
  %v781 = vpop.permute.xlu0 %780
  %786 = vst.msk [vmem:[#allocation2 + $0x20] sm:$0xff] %vm130, %v775
  %787 = vst.msk [vmem:[#allocation2 + $0x28] sm:$0xff] %vm130, %v777
  %788 = vst.msk [vmem:[#allocation2 + $0x30] sm:$0xff] %vm130, %v779
  %789 = vst.msk [vmem:[#allocation2 + $0x38] sm:$0xff] %vm130, %v781
  %790 = vrot.lane.b32.xlu0 %v738, 126
  %v791 = vpop.permute.xlu0 %790
  %792 = vrot.lane.b32.xlu0 %v743, 126
  %v793 = vpop.permute.xlu0 %792
  %794 = vrot.lane.b32.xlu0 %v748, 126
  %v795 = vpop.permute.xlu0 %794
  %796 = vrot.lane.b32.xlu0 %v753, 126
  %v797 = vpop.permute.xlu0 %796
  %802 = vst.msk [vmem:[#allocation2 + $0x40] sm:$0xff] %vm130, %v791
  %803 = vst.msk [vmem:[#allocation2 + $0x48] sm:$0xff] %vm130, %v793
  %804 = vst.msk [vmem:[#allocation2 + $0x50] sm:$0xff] %vm130, %v795
  %805 = vst.msk [vmem:[#allocation2 + $0x58] sm:$0xff] %vm130, %v797
  %v806 = vld [vmem:[#allocation2] sm:$0xff]
  %v807 = vld [vmem:[#allocation2 + $0x8] sm:$0xff]
  %v808 = vld [vmem:[#allocation2 + $0x10] sm:$0xff]
  %v809 = vld [vmem:[#allocation2 + $0x18] sm:$0xff]
  %v810 = vld [vmem:[#allocation2 + $0x20] sm:$0xff]
  %v811 = vld [vmem:[#allocation2 + $0x28] sm:$0xff]
  %v812 = vld [vmem:[#allocation2 + $0x30] sm:$0xff]
  %v813 = vld [vmem:[#allocation2 + $0x38] sm:$0xff]
  %v814 = vld [vmem:[#allocation2 + $0x40] sm:$0xff]
  %v815 = vld [vmem:[#allocation2 + $0x48] sm:$0xff]
  %v816 = vld [vmem:[#allocation2 + $0x50] sm:$0xff]
  %v817 = vld [vmem:[#allocation2 + $0x58] sm:$0xff]
  %819 = vset.pattern.permute.xlu0 0
  %820 = vperm.xlu0 %819, %v762
  %v821 = vpop.permute.xlu0 %820
  %824 = vset.pattern.permute.xlu0 0
  %825 = vperm.xlu0 %824, %v763
  %v826 = vpop.permute.xlu0 %825
  %829 = vset.pattern.permute.xlu0 0
  %830 = vperm.xlu0 %829, %v764
  %v831 = vpop.permute.xlu0 %830
  %834 = vset.pattern.permute.xlu0 0
  %835 = vperm.xlu0 %834, %v765
  %v836 = vpop.permute.xlu0 %835
  %v839 = vsel %vm499, %v757, 0
  %v842 = vsel %vm499, %v758, 0
  %v845 = vsel %vm499, %v759, 0
  %v848 = vsel %vm499, %v760, 0
  %850 = vmatprep.subr.mxu0 0.0
  %851 = vmatpush1.msra.mxu0 %v806
  %852 = vmatprep.subr.mxu0 0.0
  %853 = vmatpush1.msra.mxu0 %v807
  %854 = vmatprep.subr.mxu0 0.0
  %855 = vmatpush1.msra.mxu0 %v808
  %856 = vmatprep.subr.mxu0 0.0
  %857 = vmatpush1.msra.mxu0 %v809
  %858 = vmatprep.subr.mxu0 0.0
  %859 = vmatpush1.msra.mxu0 %v810
  %860 = vmatprep.subr.mxu0 0.0
  %861 = vmatpush1.msra.mxu0 %v811
  %862 = vmatprep.subr.mxu0 0.0
  %863 = vmatpush1.msra.mxu0 %v812
  %864 = vmatprep.subr.mxu0 0.0
  %865 = vmatpush1.msra.mxu0 %v813
  %866 = vmatprep.subr.mxu0 0.0
  %867 = vmatpush1.msra.mxu0 %v814
  %868 = vmatprep.subr.mxu0 0.0
  %869 = vmatpush1.msra.mxu0 %v815
  %870 = vmatprep.subr.mxu0 0.0
  %871 = vmatpush1.msra.mxu0 %v816
  %872 = vmatprep.subr.mxu0 0.0
  %873 = vmatpush1.msra.mxu0 %v817
  %874 = vmatprep.subr.mxu0 0.0
  %875 = vmatpush1.msra.mxu0 0.0
  %876 = vmatprep.subr.mxu0 0.0
  %877 = vmatpush1.msra.mxu0 0.0
  %878 = vmatprep.subr.mxu0 0.0
  %879 = vmatpush1.msra.mxu0 0.0
  %880 = vmatprep.subr.mxu0 0.0
  %881 = vmatpush1.msra.mxu0 0.0
  %882 = vmatprep.subr.mxu0 0.0
  %883 = vmatpush1.msra.mxu0 0.0
  %884 = vmatprep.subr.mxu0 0.0
  %885 = vmatpush1.msra.mxu0 0.0
  %886 = vmatprep.subr.mxu0 0.0
  %887 = vmatpush1.msra.mxu0 0.0
  %888 = vmatprep.subr.mxu0 0.0
  %889 = vmatpush1.msra.mxu0 0.0
  %890 = vmatprep.subr.mxu0 0.0
  %891 = vmatpush1.msra.mxu0 0.0
  %892 = vmatprep.subr.mxu0 0.0
  %893 = vmatpush1.msra.mxu0 0.0
  %894 = vmatprep.subr.mxu0 0.0
  %895 = vmatpush1.msra.mxu0 0.0
  %896 = vmatprep.subr.mxu0 0.0
  %897 = vmatpush1.msra.mxu0 0.0
  %898 = vmatprep.subr.mxu0 0.0
  %899 = vmatpush1.msra.mxu0 0.0
  %900 = vmatprep.subr.mxu0 0.0
  %901 = vmatpush1.msra.mxu0 0.0
  %902 = vmatprep.subr.mxu0 0.0
  %903 = vmatpush1.msra.mxu0 0.0
  %904 = vmatprep.subr.mxu0 0.0
  %905 = vmatpush1.msra.mxu0 0.0
  %906 = vmatprep.subr.mxu0 0.0
  %907 = vmatpush1.msra.mxu0 0.0
  %908 = vmatprep.subr.mxu0 0.0
  %909 = vmatpush1.msra.mxu0 0.0
  %910 = vmatprep.subr.mxu0 0.0
  %911 = vmatpush1.msra.mxu0 0.0
  %912 = vmatprep.subr.mxu0 0.0
  %913 = vmatpush1.msra.mxu0 0.0
  %914 = vmatprep.mubr.f32.mxu0 0.0
  %915 = vmatmul.mubr.f32.gmra.mrb[0].mxu0 %v839
  %v916 = vpop.f32.mrb[0].mxu0
  %v917 = vadd.f32 %v821, %v916
  %v918 = vpop.f32.mrb[0].mxu0
  %919 = vmatprep.mubr.f32.mxu0 0.0
  %920 = vmatmul.mubr.f32.gmra.mrb[0].mxu0 %v842
  %v921 = vpop.f32.mrb[0].mxu0
  %v922 = vadd.f32 %v826, %v921
  %v923 = vpop.f32.mrb[0].mxu0
  %924 = vmatprep.mubr.f32.mxu0 0.0
  %925 = vmatmul.mubr.f32.gmra.mrb[0].mxu0 %v845
  %v926 = vpop.f32.mrb[0].mxu0
  %v927 = vadd.f32 %v831, %v926
  %v928 = vpop.f32.mrb[0].mxu0
  %929 = vmatprep.mubr.f32.mxu0 0.0
  %930 = vmatmul.mubr.f32.gmra.mrb[0].mxu0 %v848
  %v931 = vpop.f32.mrb[0].mxu0
  %v932 = vadd.f32 %v836, %v931
  %v933 = vpop.f32.mrb[0].mxu0
  %934 = vdwg.mxu0
  %v935 = vadd.f32 %v244, %v917
  %v936 = vadd.f32 %v249, %v922
  %v937 = vadd.f32 %v254, %v927
  %v938 = vadd.f32 %v259, %v932
  %s939 = scalar_lea.vmem %s5, 64
  %v940 = vld [vmem:[%s939] sm:$0xff]
  %v941 = vld [vmem:[%s939 + $0x8] sm:$0xff]
  %v942 = vld [vmem:[%s939 + $0x10] sm:$0xff]
  %v943 = vld [vmem:[%s939 + $0x18] sm:$0xff]
  %945 = vset.pattern.permute.xlu0 0
  %946 = vperm.xlu0 %945, %v940
  %v947 = vpop.permute.xlu0 %946
  %950 = vset.pattern.permute.xlu0 0
  %951 = vperm.xlu0 %950, %v941
  %v952 = vpop.permute.xlu0 %951
  %955 = vset.pattern.permute.xlu0 0
  %956 = vperm.xlu0 %955, %v942
  %v957 = vpop.permute.xlu0 %956
  %960 = vset.pattern.permute.xlu0 0
  %961 = vperm.xlu0 %960, %v943
  %v962 = vpop.permute.xlu0 %961
  %v964 = vmul.f32 %v935, %v947
  %v965 = vmul.f32 %v936, %v952
  %v966 = vmul.f32 %v937, %v957
  %v967 = vmul.f32 %v938, %v962
  %s968 = scalar_lea.vmem %s6, 64
  %v969 = vld [vmem:[%s968] sm:$0xff]
  %v970 = vld [vmem:[%s968 + $0x8] sm:$0xff]
  %v971 = vld [vmem:[%s968 + $0x10] sm:$0xff]
  %v972 = vld [vmem:[%s968 + $0x18] sm:$0xff]
  %974 = vset.pattern.permute.xlu0 0
  %975 = vperm.xlu0 %974, %v969
  %v976 = vpop.permute.xlu0 %975
  %979 = vset.pattern.permute.xlu0 0
  %980 = vperm.xlu0 %979, %v970
  %v981 = vpop.permute.xlu0 %980
  %984 = vset.pattern.permute.xlu0 0
  %985 = vperm.xlu0 %984, %v971
  %v986 = vpop.permute.xlu0 %985
  %989 = vset.pattern.permute.xlu0 0
  %990 = vperm.xlu0 %989, %v972
  %v991 = vpop.permute.xlu0 %990
  %v993 = vadd.f32 %v964, %v976
  %v994 = vadd.f32 %v965, %v981
  %v995 = vadd.f32 %v966, %v986
  %v996 = vadd.f32 %v967, %v991
  %v997 = vmax.f32 %v993, 0.0
  %v998 = vmax.f32 %v994, 0.0
  %v999 = vmax.f32 %v995, 0.0
  %v1000 = vmax.f32 %v996, 0.0
  %v1002 = vsel %vm130, %v997, 0
  %v1005 = vsel %vm130, %v998, 0
  %v1008 = vsel %vm130, %v999, 0
  %v1011 = vsel %vm130, %v1000, 0
  %1013 = vmatprep.subr.mxu0 0.0
  %1014 = vmatpush1.msra.mxu0 %v38
  %1015 = vmatprep.subr.mxu0 0.0
  %1016 = vmatpush1.msra.mxu0 %v39
  %1017 = vmatprep.subr.mxu0 0.0
  %1018 = vmatpush1.msra.mxu0 %v40
  %1019 = vmatprep.subr.mxu0 0.0
  %1020 = vmatpush1.msra.mxu0 %v41
  %1021 = vmatprep.subr.mxu0 0.0
  %1022 = vmatpush1.msra.mxu0 %v42
  %1023 = vmatprep.subr.mxu0 0.0
  %1024 = vmatpush1.msra.mxu0 0.0
  %1025 = vmatprep.subr.mxu0 0.0
  %1026 = vmatpush1.msra.mxu0 0.0
  %1027 = vmatprep.subr.mxu0 0.0
  %1028 = vmatpush1.msra.mxu0 0.0
  %1029 = vmatprep.subr.mxu0 0.0
  %1030 = vmatpush1.msra.mxu0 0.0
  %1031 = vmatprep.subr.mxu0 0.0
  %1032 = vmatpush1.msra.mxu0 0.0
  %1033 = vmatprep.subr.mxu0 0.0
  %1034 = vmatpush1.msra.mxu0 0.0
  %1035 = vmatprep.subr.mxu0 0.0
  %1036 = vmatpush1.msra.mxu0 0.0
  %1037 = vmatprep.subr.mxu0 0.0
  %1038 = vmatpush1.msra.mxu0 0.0
  %1039 = vmatprep.subr.mxu0 0.0
  %1040 = vmatpush1.msra.mxu0 0.0
  %1041 = vmatprep.subr.mxu0 0.0
  %1042 = vmatpush1.msra.mxu0 0.0
  %1043 = vmatprep.subr.mxu0 0.0
  %1044 = vmatpush1.msra.mxu0 0.0
  %1045 = vmatprep.subr.mxu0 0.0
  %1046 = vmatpush1.msra.mxu0 0.0
  %1047 = vmatprep.subr.mxu0 0.0
  %1048 = vmatpush1.msra.mxu0 0.0
  %1049 = vmatprep.subr.mxu0 0.0
  %1050 = vmatpush1.msra.mxu0 0.0
  %1051 = vmatprep.subr.mxu0 0.0
  %1052 = vmatpush1.msra.mxu0 0.0
  %1053 = vmatprep.subr.mxu0 0.0
  %1054 = vmatpush1.msra.mxu0 0.0
  %1055 = vmatprep.subr.mxu0 0.0
  %1056 = vmatpush1.msra.mxu0 0.0
  %1057 = vmatprep.subr.mxu0 0.0
  %1058 = vmatpush1.msra.mxu0 0.0
  %1059 = vmatprep.subr.mxu0 0.0
  %1060 = vmatpush1.msra.mxu0 0.0
  %1061 = vmatprep.subr.mxu0 0.0
  %1062 = vmatpush1.msra.mxu0 0.0
  %1063 = vmatprep.subr.mxu0 0.0
  %1064 = vmatpush1.msra.mxu0 0.0
  %1065 = vmatprep.subr.mxu0 0.0
  %1066 = vmatpush1.msra.mxu0 0.0
  %1067 = vmatprep.subr.mxu0 0.0
  %1068 = vmatpush1.msra.mxu0 0.0
  %1069 = vmatprep.subr.mxu0 0.0
  %1070 = vmatpush1.msra.mxu0 0.0
  %1071 = vmatprep.subr.mxu0 0.0
  %1072 = vmatpush1.msra.mxu0 0.0
  %1073 = vmatprep.subr.mxu0 0.0
  %1074 = vmatpush1.msra.mxu0 0.0
  %1075 = vmatprep.subr.mxu0 0.0
  %1076 = vmatpush1.msra.mxu0 0.0
  %1077 = vmatprep.mubr.f32.mxu0 0.0
  %1078 = vmatmul.mubr.f32.gmra.mrb[0].mxu0 %v1002
  %v1079 = vpop.f32.mrb[0].mxu0
  %v1080 = vadd.f32 0.0, %v1079
  %v1081 = vpop.f32.mrb[0].mxu0
  %1082 = vmatprep.mubr.f32.mxu0 0.0
  %1083 = vmatmul.mubr.f32.gmra.mrb[0].mxu0 %v1005
  %v1084 = vpop.f32.mrb[0].mxu0
  %v1085 = vadd.f32 0.0, %v1084
  %v1086 = vpop.f32.mrb[0].mxu0
  %1087 = vmatprep.mubr.f32.mxu0 0.0
  %1088 = vmatmul.mubr.f32.gmra.mrb[0].mxu0 %v1008
  %v1089 = vpop.f32.mrb[0].mxu0
  %v1090 = vadd.f32 0.0, %v1089
  %v1091 = vpop.f32.mrb[0].mxu0
  %1092 = vmatprep.mubr.f32.mxu0 0.0
  %1093 = vmatmul.mubr.f32.gmra.mrb[0].mxu0 %v1011
  %v1094 = vpop.f32.mrb[0].mxu0
  %v1095 = vadd.f32 0.0, %v1094
  %v1096 = vpop.f32.mrb[0].mxu0
  %1097 = vdwg.mxu0
  %s1098 = scalar_lea.vmem %s7, 64
  %v1099 = vld [vmem:[%s1098] sm:$0xff]
  %v1100 = vld [vmem:[%s1098 + $0x8] sm:$0xff]
  %v1101 = vld [vmem:[%s1098 + $0x10] sm:$0xff]
  %v1102 = vld [vmem:[%s1098 + $0x18] sm:$0xff]
  %s1103 = scalar_lea.vmem %s8, 64
  %v1104 = vld [vmem:[%s1103] sm:$0xff]
  %v1105 = vld [vmem:[%s1103 + $0x8] sm:$0xff]
  %v1106 = vld [vmem:[%s1103 + $0x10] sm:$0xff]
  %v1107 = vld [vmem:[%s1103 + $0x18] sm:$0xff]
  %1108 = vst.msk [vmem:[#allocation2] sm:$0xff] %vm130, %v1080
  %1109 = vst.msk [vmem:[#allocation2 + $0x8] sm:$0xff] %vm130, %v1085
  %1110 = vst.msk [vmem:[#allocation2 + $0x10] sm:$0xff] %vm130, %v1090
  %1111 = vst.msk [vmem:[#allocation2 + $0x18] sm:$0xff] %vm130, %v1095
  %1116 = vrot.lane.b32.xlu0 %v1080, 127
  %v1117 = vpop.permute.xlu0 %1116
  %1118 = vrot.lane.b32.xlu0 %v1085, 127
  %v1119 = vpop.permute.xlu0 %1118
  %1120 = vrot.lane.b32.xlu0 %v1090, 127
  %v1121 = vpop.permute.xlu0 %1120
  %1122 = vrot.lane.b32.xlu0 %v1095, 127
  %v1123 = vpop.permute.xlu0 %1122
  %1128 = vst.msk [vmem:[#allocation2 + $0x20] sm:$0xff] %vm130, %v1117
  %1129 = vst.msk [vmem:[#allocation2 + $0x28] sm:$0xff] %vm130, %v1119
  %1130 = vst.msk [vmem:[#allocation2 + $0x30] sm:$0xff] %vm130, %v1121
  %1131 = vst.msk [vmem:[#allocation2 + $0x38] sm:$0xff] %vm130, %v1123
  %1132 = vrot.lane.b32.xlu0 %v1080, 126
  %v1133 = vpop.permute.xlu0 %1132
  %1134 = vrot.lane.b32.xlu0 %v1085, 126
  %v1135 = vpop.permute.xlu0 %1134
  %1136 = vrot.lane.b32.xlu0 %v1090, 126
  %v1137 = vpop.permute.xlu0 %1136
  %1138 = vrot.lane.b32.xlu0 %v1095, 126
  %v1139 = vpop.permute.xlu0 %1138
  %1144 = vst.msk [vmem:[#allocation2 + $0x40] sm:$0xff] %vm130, %v1133
  %1145 = vst.msk [vmem:[#allocation2 + $0x48] sm:$0xff] %vm130, %v1135
  %1146 = vst.msk [vmem:[#allocation2 + $0x50] sm:$0xff] %vm130, %v1137
  %1147 = vst.msk [vmem:[#allocation2 + $0x58] sm:$0xff] %vm130, %v1139
  %v1148 = vld [vmem:[#allocation2] sm:$0xff]
  %v1149 = vld [vmem:[#allocation2 + $0x8] sm:$0xff]
  %v1150 = vld [vmem:[#allocation2 + $0x10] sm:$0xff]
  %v1151 = vld [vmem:[#allocation2 + $0x18] sm:$0xff]
  %v1152 = vld [vmem:[#allocation2 + $0x20] sm:$0xff]
  %v1153 = vld [vmem:[#allocation2 + $0x28] sm:$0xff]
  %v1154 = vld [vmem:[#allocation2 + $0x30] sm:$0xff]
  %v1155 = vld [vmem:[#allocation2 + $0x38] sm:$0xff]
  %v1156 = vld [vmem:[#allocation2 + $0x40] sm:$0xff]
  %v1157 = vld [vmem:[#allocation2 + $0x48] sm:$0xff]
  %v1158 = vld [vmem:[#allocation2 + $0x50] sm:$0xff]
  %v1159 = vld [vmem:[#allocation2 + $0x58] sm:$0xff]
  %1161 = vset.pattern.permute.xlu0 0
  %1162 = vperm.xlu0 %1161, %v1104
  %v1163 = vpop.permute.xlu0 %1162
  %1166 = vset.pattern.permute.xlu0 0
  %1167 = vperm.xlu0 %1166, %v1105
  %v1168 = vpop.permute.xlu0 %1167
  %1171 = vset.pattern.permute.xlu0 0
  %1172 = vperm.xlu0 %1171, %v1106
  %v1173 = vpop.permute.xlu0 %1172
  %1176 = vset.pattern.permute.xlu0 0
  %1177 = vperm.xlu0 %1176, %v1107
  %v1178 = vpop.permute.xlu0 %1177
  %v1181 = vsel %vm499, %v1099, 0
  %v1184 = vsel %vm499, %v1100, 0
  %v1187 = vsel %vm499, %v1101, 0
  %v1190 = vsel %vm499, %v1102, 0
  %1192 = vmatprep.subr.mxu0 0.0
  %1193 = vmatpush1.msra.mxu0 %v1148
  %1194 = vmatprep.subr.mxu0 0.0
  %1195 = vmatpush1.msra.mxu0 %v1149
  %1196 = vmatprep.subr.mxu0 0.0
  %1197 = vmatpush1.msra.mxu0 %v1150
  %1198 = vmatprep.subr.mxu0 0.0
  %1199 = vmatpush1.msra.mxu0 %v1151
  %1200 = vmatprep.subr.mxu0 0.0
  %1201 = vmatpush1.msra.mxu0 %v1152
  %1202 = vmatprep.subr.mxu0 0.0
  %1203 = vmatpush1.msra.mxu0 %v1153
  %1204 = vmatprep.subr.mxu0 0.0
  %1205 = vmatpush1.msra.mxu0 %v1154
  %1206 = vmatprep.subr.mxu0 0.0
  %1207 = vmatpush1.msra.mxu0 %v1155
  %1208 = vmatprep.subr.mxu0 0.0
  %1209 = vmatpush1.msra.mxu0 %v1156
  %1210 = vmatprep.subr.mxu0 0.0
  %1211 = vmatpush1.msra.mxu0 %v1157
  %1212 = vmatprep.subr.mxu0 0.0
  %1213 = vmatpush1.msra.mxu0 %v1158
  %1214 = vmatprep.subr.mxu0 0.0
  %1215 = vmatpush1.msra.mxu0 %v1159
  %1216 = vmatprep.subr.mxu0 0.0
  %1217 = vmatpush1.msra.mxu0 0.0
  %1218 = vmatprep.subr.mxu0 0.0
  %1219 = vmatpush1.msra.mxu0 0.0
  %1220 = vmatprep.subr.mxu0 0.0
  %1221 = vmatpush1.msra.mxu0 0.0
  %1222 = vmatprep.subr.mxu0 0.0
  %1223 = vmatpush1.msra.mxu0 0.0
  %1224 = vmatprep.subr.mxu0 0.0
  %1225 = vmatpush1.msra.mxu0 0.0
  %1226 = vmatprep.subr.mxu0 0.0
  %1227 = vmatpush1.msra.mxu0 0.0
  %1228 = vmatprep.subr.mxu0 0.0
  %1229 = vmatpush1.msra.mxu0 0.0
  %1230 = vmatprep.subr.mxu0 0.0
  %1231 = vmatpush1.msra.mxu0 0.0
  %1232 = vmatprep.subr.mxu0 0.0
  %1233 = vmatpush1.msra.mxu0 0.0
  %1234 = vmatprep.subr.mxu0 0.0
  %1235 = vmatpush1.msra.mxu0 0.0
  %1236 = vmatprep.subr.mxu0 0.0
  %1237 = vmatpush1.msra.mxu0 0.0
  %1238 = vmatprep.subr.mxu0 0.0
  %1239 = vmatpush1.msra.mxu0 0.0
  %1240 = vmatprep.subr.mxu0 0.0
  %1241 = vmatpush1.msra.mxu0 0.0
  %1242 = vmatprep.subr.mxu0 0.0
  %1243 = vmatpush1.msra.mxu0 0.0
  %1244 = vmatprep.subr.mxu0 0.0
  %1245 = vmatpush1.msra.mxu0 0.0
  %1246 = vmatprep.subr.mxu0 0.0
  %1247 = vmatpush1.msra.mxu0 0.0
  %1248 = vmatprep.subr.mxu0 0.0
  %1249 = vmatpush1.msra.mxu0 0.0
  %1250 = vmatprep.subr.mxu0 0.0
  %1251 = vmatpush1.msra.mxu0 0.0
  %1252 = vmatprep.subr.mxu0 0.0
  %1253 = vmatpush1.msra.mxu0 0.0
  %1254 = vmatprep.subr.mxu0 0.0
  %1255 = vmatpush1.msra.mxu0 0.0
  %1256 = vmatprep.mubr.f32.mxu0 0.0
  %1257 = vmatmul.mubr.f32.gmra.mrb[0].mxu0 %v1181
  %v1258 = vpop.f32.mrb[0].mxu0
  %v1259 = vadd.f32 %v1163, %v1258
  %v1260 = vpop.f32.mrb[0].mxu0
  %1261 = vmatprep.mubr.f32.mxu0 0.0
  %1262 = vmatmul.mubr.f32.gmra.mrb[0].mxu0 %v1184
  %v1263 = vpop.f32.mrb[0].mxu0
  %v1264 = vadd.f32 %v1168, %v1263
  %v1265 = vpop.f32.mrb[0].mxu0
  %1266 = vmatprep.mubr.f32.mxu0 0.0
  %1267 = vmatmul.mubr.f32.gmra.mrb[0].mxu0 %v1187
  %v1268 = vpop.f32.mrb[0].mxu0
  %v1269 = vadd.f32 %v1173, %v1268
  %v1270 = vpop.f32.mrb[0].mxu0
  %1271 = vmatprep.mubr.f32.mxu0 0.0
  %1272 = vmatmul.mubr.f32.gmra.mrb[0].mxu0 %v1190
  %v1273 = vpop.f32.mrb[0].mxu0
  %v1274 = vadd.f32 %v1178, %v1273
  %v1275 = vpop.f32.mrb[0].mxu0
  %1276 = vdwg.mxu0
  %s1277 = scalar_lea.vmem %s5, 96
  %v1278 = vld [vmem:[%s1277] sm:$0xff]
  %v1279 = vld [vmem:[%s1277 + $0x8] sm:$0xff]
  %v1280 = vld [vmem:[%s1277 + $0x10] sm:$0xff]
  %v1281 = vld [vmem:[%s1277 + $0x18] sm:$0xff]
  %1283 = vset.pattern.permute.xlu0 0
  %1284 = vperm.xlu0 %1283, %v1278
  %v1285 = vpop.permute.xlu0 %1284
  %1288 = vset.pattern.permute.xlu0 0
  %1289 = vperm.xlu0 %1288, %v1279
  %v1290 = vpop.permute.xlu0 %1289
  %1293 = vset.pattern.permute.xlu0 0
  %1294 = vperm.xlu0 %1293, %v1280
  %v1295 = vpop.permute.xlu0 %1294
  %1298 = vset.pattern.permute.xlu0 0
  %1299 = vperm.xlu0 %1298, %v1281
  %v1300 = vpop.permute.xlu0 %1299
  %v1302 = vmul.f32 %v1259, %v1285
  %v1303 = vmul.f32 %v1264, %v1290
  %v1304 = vmul.f32 %v1269, %v1295
  %v1305 = vmul.f32 %v1274, %v1300
  %s1306 = scalar_lea.vmem %s6, 96
  %v1307 = vld [vmem:[%s1306] sm:$0xff]
  %v1308 = vld [vmem:[%s1306 + $0x8] sm:$0xff]
  %v1309 = vld [vmem:[%s1306 + $0x10] sm:$0xff]
  %v1310 = vld [vmem:[%s1306 + $0x18] sm:$0xff]
  %1312 = vset.pattern.permute.xlu0 0
  %1313 = vperm.xlu0 %1312, %v1307
  %v1314 = vpop.permute.xlu0 %1313
  %1317 = vset.pattern.permute.xlu0 0
  %1318 = vperm.xlu0 %1317, %v1308
  %v1319 = vpop.permute.xlu0 %1318
  %1322 = vset.pattern.permute.xlu0 0
  %1323 = vperm.xlu0 %1322, %v1309
  %v1324 = vpop.permute.xlu0 %1323
  %1327 = vset.pattern.permute.xlu0 0
  %1328 = vperm.xlu0 %1327, %v1310
  %v1329 = vpop.permute.xlu0 %1328
  %v1331 = vadd.f32 %v1302, %v1314
  %v1332 = vadd.f32 %v1303, %v1319
  %v1333 = vadd.f32 %v1304, %v1324
  %v1334 = vadd.f32 %v1305, %v1329
  %v1335 = vmax.f32 %v1331, 0.0
  %v1336 = vmax.f32 %v1332, 0.0
  %v1337 = vmax.f32 %v1333, 0.0
  %v1338 = vmax.f32 %v1334, 0.0
  %v1340 = vsel %vm130, %v1335, 0
  %v1343 = vsel %vm130, %v1336, 0
  %v1346 = vsel %vm130, %v1337, 0
  %v1349 = vsel %vm130, %v1338, 0
  %1351 = vmatprep.subr.mxu0 0.0
  %1352 = vmatpush1.msra.mxu0 %v38
  %1353 = vmatprep.subr.mxu0 0.0
  %1354 = vmatpush1.msra.mxu0 %v39
  %1355 = vmatprep.subr.mxu0 0.0
  %1356 = vmatpush1.msra.mxu0 %v40
  %1357 = vmatprep.subr.mxu0 0.0
  %1358 = vmatpush1.msra.mxu0 %v41
  %1359 = vmatprep.subr.mxu0 0.0
  %1360 = vmatpush1.msra.mxu0 %v42
  %1361 = vmatprep.subr.mxu0 0.0
  %1362 = vmatpush1.msra.mxu0 0.0
  %1363 = vmatprep.subr.mxu0 0.0
  %1364 = vmatpush1.msra.mxu0 0.0
  %1365 = vmatprep.subr.mxu0 0.0
  %1366 = vmatpush1.msra.mxu0 0.0
  %1367 = vmatprep.subr.mxu0 0.0
  %1368 = vmatpush1.msra.mxu0 0.0
  %1369 = vmatprep.subr.mxu0 0.0
  %1370 = vmatpush1.msra.mxu0 0.0
  %1371 = vmatprep.subr.mxu0 0.0
  %1372 = vmatpush1.msra.mxu0 0.0
  %1373 = vmatprep.subr.mxu0 0.0
  %1374 = vmatpush1.msra.mxu0 0.0
  %1375 = vmatprep.subr.mxu0 0.0
  %1376 = vmatpush1.msra.mxu0 0.0
  %1377 = vmatprep.subr.mxu0 0.0
  %1378 = vmatpush1.msra.mxu0 0.0
  %1379 = vmatprep.subr.mxu0 0.0
  %1380 = vmatpush1.msra.mxu0 0.0
  %1381 = vmatprep.subr.mxu0 0.0
  %1382 = vmatpush1.msra.mxu0 0.0
  %1383 = vmatprep.subr.mxu0 0.0
  %1384 = vmatpush1.msra.mxu0 0.0
  %1385 = vmatprep.subr.mxu0 0.0
  %1386 = vmatpush1.msra.mxu0 0.0
  %1387 = vmatprep.subr.mxu0 0.0
  %1388 = vmatpush1.msra.mxu0 0.0
  %1389 = vmatprep.subr.mxu0 0.0
  %1390 = vmatpush1.msra.mxu0 0.0
  %1391 = vmatprep.subr.mxu0 0.0
  %1392 = vmatpush1.msra.mxu0 0.0
  %1393 = vmatprep.subr.mxu0 0.0
  %1394 = vmatpush1.msra.mxu0 0.0
  %1395 = vmatprep.subr.mxu0 0.0
  %1396 = vmatpush1.msra.mxu0 0.0
  %1397 = vmatprep.subr.mxu0 0.0
  %1398 = vmatpush1.msra.mxu0 0.0
  %1399 = vmatprep.subr.mxu0 0.0
  %1400 = vmatpush1.msra.mxu0 0.0
  %1401 = vmatprep.subr.mxu0 0.0
  %1402 = vmatpush1.msra.mxu0 0.0
  %1403 = vmatprep.subr.mxu0 0.0
  %1404 = vmatpush1.msra.mxu0 0.0
  %1405 = vmatprep.subr.mxu0 0.0
  %1406 = vmatpush1.msra.mxu0 0.0
  %1407 = vmatprep.subr.mxu0 0.0
  %1408 = vmatpush1.msra.mxu0 0.0
  %1409 = vmatprep.subr.mxu0 0.0
  %1410 = vmatpush1.msra.mxu0 0.0
  %1411 = vmatprep.subr.mxu0 0.0
  %1412 = vmatpush1.msra.mxu0 0.0
  %1413 = vmatprep.subr.mxu0 0.0
  %1414 = vmatpush1.msra.mxu0 0.0
  %1415 = vmatprep.mubr.f32.mxu0 0.0
  %1416 = vmatmul.mubr.f32.gmra.mrb[0].mxu0 %v1340
  %v1417 = vpop.f32.mrb[0].mxu0
  %v1418 = vadd.f32 0.0, %v1417
  %v1419 = vpop.f32.mrb[0].mxu0
  %1420 = vmatprep.mubr.f32.mxu0 0.0
  %1421 = vmatmul.mubr.f32.gmra.mrb[0].mxu0 %v1343
  %v1422 = vpop.f32.mrb[0].mxu0
  %v1423 = vadd.f32 0.0, %v1422
  %v1424 = vpop.f32.mrb[0].mxu0
  %1425 = vmatprep.mubr.f32.mxu0 0.0
  %1426 = vmatmul.mubr.f32.gmra.mrb[0].mxu0 %v1346
  %v1427 = vpop.f32.mrb[0].mxu0
  %v1428 = vadd.f32 0.0, %v1427
  %v1429 = vpop.f32.mrb[0].mxu0
  %1430 = vmatprep.mubr.f32.mxu0 0.0
  %1431 = vmatmul.mubr.f32.gmra.mrb[0].mxu0 %v1349
  %v1432 = vpop.f32.mrb[0].mxu0
  %v1433 = vadd.f32 0.0, %v1432
  %v1434 = vpop.f32.mrb[0].mxu0
  %1435 = vdwg.mxu0
  %s1436 = scalar_lea.vmem %s7, 96
  %v1437 = vld [vmem:[%s1436] sm:$0xff]
  %v1438 = vld [vmem:[%s1436 + $0x8] sm:$0xff]
  %v1439 = vld [vmem:[%s1436 + $0x10] sm:$0xff]
  %v1440 = vld [vmem:[%s1436 + $0x18] sm:$0xff]
  %s1441 = scalar_lea.vmem %s8, 96
  %v1442 = vld [vmem:[%s1441] sm:$0xff]
  %v1443 = vld [vmem:[%s1441 + $0x8] sm:$0xff]
  %v1444 = vld [vmem:[%s1441 + $0x10] sm:$0xff]
  %v1445 = vld [vmem:[%s1441 + $0x18] sm:$0xff]
  %1446 = vst.msk [vmem:[#allocation2] sm:$0xff] %vm130, %v1418
  %1447 = vst.msk [vmem:[#allocation2 + $0x8] sm:$0xff] %vm130, %v1423
  %1448 = vst.msk [vmem:[#allocation2 + $0x10] sm:$0xff] %vm130, %v1428
  %1449 = vst.msk [vmem:[#allocation2 + $0x18] sm:$0xff] %vm130, %v1433
  %1454 = vrot.lane.b32.xlu0 %v1418, 127
  %v1455 = vpop.permute.xlu0 %1454
  %1456 = vrot.lane.b32.xlu0 %v1423, 127
  %v1457 = vpop.permute.xlu0 %1456
  %1458 = vrot.lane.b32.xlu0 %v1428, 127
  %v1459 = vpop.permute.xlu0 %1458
  %1460 = vrot.lane.b32.xlu0 %v1433, 127
  %v1461 = vpop.permute.xlu0 %1460
  %1466 = vst.msk [vmem:[#allocation2 + $0x20] sm:$0xff] %vm130, %v1455
  %1467 = vst.msk [vmem:[#allocation2 + $0x28] sm:$0xff] %vm130, %v1457
  %1468 = vst.msk [vmem:[#allocation2 + $0x30] sm:$0xff] %vm130, %v1459
  %1469 = vst.msk [vmem:[#allocation2 + $0x38] sm:$0xff] %vm130, %v1461
  %1470 = vrot.lane.b32.xlu0 %v1418, 126
  %v1471 = vpop.permute.xlu0 %1470
  %1472 = vrot.lane.b32.xlu0 %v1423, 126
  %v1473 = vpop.permute.xlu0 %1472
  %1474 = vrot.lane.b32.xlu0 %v1428, 126
  %v1475 = vpop.permute.xlu0 %1474
  %1476 = vrot.lane.b32.xlu0 %v1433, 126
  %v1477 = vpop.permute.xlu0 %1476
  %1482 = vst.msk [vmem:[#allocation2 + $0x40] sm:$0xff] %vm130, %v1471
  %1483 = vst.msk [vmem:[#allocation2 + $0x48] sm:$0xff] %vm130, %v1473
  %1484 = vst.msk [vmem:[#allocation2 + $0x50] sm:$0xff] %vm130, %v1475
  %1485 = vst.msk [vmem:[#allocation2 + $0x58] sm:$0xff] %vm130, %v1477
  %v1486 = vld [vmem:[#allocation2] sm:$0xff]
  %v1487 = vld [vmem:[#allocation2 + $0x8] sm:$0xff]
  %v1488 = vld [vmem:[#allocation2 + $0x10] sm:$0xff]
  %v1489 = vld [vmem:[#allocation2 + $0x18] sm:$0xff]
  %v1490 = vld [vmem:[#allocation2 + $0x20] sm:$0xff]
  %v1491 = vld [vmem:[#allocation2 + $0x28] sm:$0xff]
  %v1492 = vld [vmem:[#allocation2 + $0x30] sm:$0xff]
  %v1493 = vld [vmem:[#allocation2 + $0x38] sm:$0xff]
  %v1494 = vld [vmem:[#allocation2 + $0x40] sm:$0xff]
  %v1495 = vld [vmem:[#allocation2 + $0x48] sm:$0xff]
  %v1496 = vld [vmem:[#allocation2 + $0x50] sm:$0xff]
  %v1497 = vld [vmem:[#allocation2 + $0x58] sm:$0xff]
  %1499 = vset.pattern.permute.xlu0 0
  %1500 = vperm.xlu0 %1499, %v1442
  %v1501 = vpop.permute.xlu0 %1500
  %1504 = vset.pattern.permute.xlu0 0
  %1505 = vperm.xlu0 %1504, %v1443
  %v1506 = vpop.permute.xlu0 %1505
  %1509 = vset.pattern.permute.xlu0 0
  %1510 = vperm.xlu0 %1509, %v1444
  %v1511 = vpop.permute.xlu0 %1510
  %1514 = vset.pattern.permute.xlu0 0
  %1515 = vperm.xlu0 %1514, %v1445
  %v1516 = vpop.permute.xlu0 %1515
  %v1519 = vsel %vm499, %v1437, 0
  %v1522 = vsel %vm499, %v1438, 0
  %v1525 = vsel %vm499, %v1439, 0
  %v1528 = vsel %vm499, %v1440, 0
  %1530 = vmatprep.subr.mxu0 0.0
  %1531 = vmatpush1.msra.mxu0 %v1486
  %1532 = vmatprep.subr.mxu0 0.0
  %1533 = vmatpush1.msra.mxu0 %v1487
  %1534 = vmatprep.subr.mxu0 0.0
  %1535 = vmatpush1.msra.mxu0 %v1488
  %1536 = vmatprep.subr.mxu0 0.0
  %1537 = vmatpush1.msra.mxu0 %v1489
  %1538 = vmatprep.subr.mxu0 0.0
  %1539 = vmatpush1.msra.mxu0 %v1490
  %1540 = vmatprep.subr.mxu0 0.0
  %1541 = vmatpush1.msra.mxu0 %v1491
  %1542 = vmatprep.subr.mxu0 0.0
  %1543 = vmatpush1.msra.mxu0 %v1492
  %1544 = vmatprep.subr.mxu0 0.0
  %1545 = vmatpush1.msra.mxu0 %v1493
  %1546 = vmatprep.subr.mxu0 0.0
  %1547 = vmatpush1.msra.mxu0 %v1494
  %1548 = vmatprep.subr.mxu0 0.0
  %1549 = vmatpush1.msra.mxu0 %v1495
  %1550 = vmatprep.subr.mxu0 0.0
  %1551 = vmatpush1.msra.mxu0 %v1496
  %1552 = vmatprep.subr.mxu0 0.0
  %1553 = vmatpush1.msra.mxu0 %v1497
  %1554 = vmatprep.subr.mxu0 0.0
  %1555 = vmatpush1.msra.mxu0 0.0
  %1556 = vmatprep.subr.mxu0 0.0
  %1557 = vmatpush1.msra.mxu0 0.0
  %1558 = vmatprep.subr.mxu0 0.0
  %1559 = vmatpush1.msra.mxu0 0.0
  %1560 = vmatprep.subr.mxu0 0.0
  %1561 = vmatpush1.msra.mxu0 0.0
  %1562 = vmatprep.subr.mxu0 0.0
  %1563 = vmatpush1.msra.mxu0 0.0
  %1564 = vmatprep.subr.mxu0 0.0
  %1565 = vmatpush1.msra.mxu0 0.0
  %1566 = vmatprep.subr.mxu0 0.0
  %1567 = vmatpush1.msra.mxu0 0.0
  %1568 = vmatprep.subr.mxu0 0.0
  %1569 = vmatpush1.msra.mxu0 0.0
  %1570 = vmatprep.subr.mxu0 0.0
  %1571 = vmatpush1.msra.mxu0 0.0
  %1572 = vmatprep.subr.mxu0 0.0
  %1573 = vmatpush1.msra.mxu0 0.0
  %1574 = vmatprep.subr.mxu0 0.0
  %1575 = vmatpush1.msra.mxu0 0.0
  %1576 = vmatprep.subr.mxu0 0.0
  %1577 = vmatpush1.msra.mxu0 0.0
  %1578 = vmatprep.subr.mxu0 0.0
  %1579 = vmatpush1.msra.mxu0 0.0
  %1580 = vmatprep.subr.mxu0 0.0
  %1581 = vmatpush1.msra.mxu0 0.0
  %1582 = vmatprep.subr.mxu0 0.0
  %1583 = vmatpush1.msra.mxu0 0.0
  %1584 = vmatprep.subr.mxu0 0.0
  %1585 = vmatpush1.msra.mxu0 0.0
  %1586 = vmatprep.subr.mxu0 0.0
  %1587 = vmatpush1.msra.mxu0 0.0
  %1588 = vmatprep.subr.mxu0 0.0
  %1589 = vmatpush1.msra.mxu0 0.0
  %1590 = vmatprep.subr.mxu0 0.0
  %1591 = vmatpush1.msra.mxu0 0.0
  %1592 = vmatprep.subr.mxu0 0.0
  %1593 = vmatpush1.msra.mxu0 0.0
  %1594 = vmatprep.mubr.f32.mxu0 0.0
  %1595 = vmatmul.mubr.f32.gmra.mrb[0].mxu0 %v1519
  %v1596 = vpop.f32.mrb[0].mxu0
  %v1597 = vadd.f32 %v1501, %v1596
  %v1598 = vpop.f32.mrb[0].mxu0
  %1599 = vmatprep.mubr.f32.mxu0 0.0
  %1600 = vmatmul.mubr.f32.gmra.mrb[0].mxu0 %v1522
  %v1601 = vpop.f32.mrb[0].mxu0
  %v1602 = vadd.f32 %v1506, %v1601
  %v1603 = vpop.f32.mrb[0].mxu0
  %1604 = vmatprep.mubr.f32.mxu0 0.0
  %1605 = vmatmul.mubr.f32.gmra.mrb[0].mxu0 %v1525
  %v1606 = vpop.f32.mrb[0].mxu0
  %v1607 = vadd.f32 %v1511, %v1606
  %v1608 = vpop.f32.mrb[0].mxu0
  %1609 = vmatprep.mubr.f32.mxu0 0.0
  %1610 = vmatmul.mubr.f32.gmra.mrb[0].mxu0 %v1528
  %v1611 = vpop.f32.mrb[0].mxu0
  %v1612 = vadd.f32 %v1516, %v1611
  %v1613 = vpop.f32.mrb[0].mxu0
  %1614 = vdwg.mxu0
  %v1615 = vadd.f32 %v935, %v1597
  %v1616 = vadd.f32 %v936, %v1602
  %v1617 = vadd.f32 %v937, %v1607
  %v1618 = vadd.f32 %v938, %v1612
  %v1620 = vsel %vm130, %v1615, 0
  %v1623 = vsel %vm130, %v1616, 0
  %v1626 = vsel %vm130, %v1617, 0
  %v1629 = vsel %vm130, %v1618, 0
  %1631 = vmatprep.subr.mxu0 0.0
  %1632 = vmatpush1.msra.mxu0 %v38
  %1633 = vmatprep.subr.mxu0 0.0
  %1634 = vmatpush1.msra.mxu0 %v39
  %1635 = vmatprep.subr.mxu0 0.0
  %1636 = vmatpush1.msra.mxu0 %v40
  %1637 = vmatprep.subr.mxu0 0.0
  %1638 = vmatpush1.msra.mxu0 %v41
  %1639 = vmatprep.subr.mxu0 0.0
  %1640 = vmatpush1.msra.mxu0 %v42
  %1641 = vmatprep.subr.mxu0 0.0
  %1642 = vmatpush1.msra.mxu0 0.0
  %1643 = vmatprep.subr.mxu0 0.0
  %1644 = vmatpush1.msra.mxu0 0.0
  %1645 = vmatprep.subr.mxu0 0.0
  %1646 = vmatpush1.msra.mxu0 0.0
  %1647 = vmatprep.subr.mxu0 0.0
  %1648 = vmatpush1.msra.mxu0 0.0
  %1649 = vmatprep.subr.mxu0 0.0
  %1650 = vmatpush1.msra.mxu0 0.0
  %1651 = vmatprep.subr.mxu0 0.0
  %1652 = vmatpush1.msra.mxu0 0.0
  %1653 = vmatprep.subr.mxu0 0.0
  %1654 = vmatpush1.msra.mxu0 0.0
  %1655 = vmatprep.subr.mxu0 0.0
  %1656 = vmatpush1.msra.mxu0 0.0
  %1657 = vmatprep.subr.mxu0 0.0
  %1658 = vmatpush1.msra.mxu0 0.0
  %1659 = vmatprep.subr.mxu0 0.0
  %1660 = vmatpush1.msra.mxu0 0.0
  %1661 = vmatprep.subr.mxu0 0.0
  %1662 = vmatpush1.msra.mxu0 0.0
  %1663 = vmatprep.subr.mxu0 0.0
  %1664 = vmatpush1.msra.mxu0 0.0
  %1665 = vmatprep.subr.mxu0 0.0
  %1666 = vmatpush1.msra.mxu0 0.0
  %1667 = vmatprep.subr.mxu0 0.0
  %1668 = vmatpush1.msra.mxu0 0.0
  %1669 = vmatprep.subr.mxu0 0.0
  %1670 = vmatpush1.msra.mxu0 0.0
  %1671 = vmatprep.subr.mxu0 0.0
  %1672 = vmatpush1.msra.mxu0 0.0
  %1673 = vmatprep.subr.mxu0 0.0
  %1674 = vmatpush1.msra.mxu0 0.0
  %1675 = vmatprep.subr.mxu0 0.0
  %1676 = vmatpush1.msra.mxu0 0.0
  %1677 = vmatprep.subr.mxu0 0.0
  %1678 = vmatpush1.msra.mxu0 0.0
  %1679 = vmatprep.subr.mxu0 0.0
  %1680 = vmatpush1.msra.mxu0 0.0
  %1681 = vmatprep.subr.mxu0 0.0
  %1682 = vmatpush1.msra.mxu0 0.0
  %1683 = vmatprep.subr.mxu0 0.0
  %1684 = vmatpush1.msra.mxu0 0.0
  %1685 = vmatprep.subr.mxu0 0.0
  %1686 = vmatpush1.msra.mxu0 0.0
  %1687 = vmatprep.subr.mxu0 0.0
  %1688 = vmatpush1.msra.mxu0 0.0
  %1689 = vmatprep.subr.mxu0 0.0
  %1690 = vmatpush1.msra.mxu0 0.0
  %1691 = vmatprep.subr.mxu0 0.0
  %1692 = vmatpush1.msra.mxu0 0.0
  %1693 = vmatprep.subr.mxu0 0.0
  %1694 = vmatpush1.msra.mxu0 0.0
  %1695 = vmatprep.mubr.f32.mxu0 0.0
  %1696 = vmatmul.mubr.f32.gmra.mrb[0].mxu0 %v1620
  %v1697 = vpop.f32.mrb[0].mxu0
  %v1698 = vadd.f32 0.0, %v1697
  %v1699 = vpop.f32.mrb[0].mxu0
  %1700 = vmatprep.mubr.f32.mxu0 0.0
  %1701 = vmatmul.mubr.f32.gmra.mrb[0].mxu0 %v1623
  %v1702 = vpop.f32.mrb[0].mxu0
  %v1703 = vadd.f32 0.0, %v1702
  %v1704 = vpop.f32.mrb[0].mxu0
  %1705 = vmatprep.mubr.f32.mxu0 0.0
  %1706 = vmatmul.mubr.f32.gmra.mrb[0].mxu0 %v1626
  %v1707 = vpop.f32.mrb[0].mxu0
  %v1708 = vadd.f32 0.0, %v1707
  %v1709 = vpop.f32.mrb[0].mxu0
  %1710 = vmatprep.mubr.f32.mxu0 0.0
  %1711 = vmatmul.mubr.f32.gmra.mrb[0].mxu0 %v1629
  %v1712 = vpop.f32.mrb[0].mxu0
  %v1713 = vadd.f32 0.0, %v1712
  %v1714 = vpop.f32.mrb[0].mxu0
  %1715 = vdwg.mxu0
  %v1716 = vld [vmem:[%s9] sm:$0xf]
  %v1717 = vld [vmem:[%s10] sm:$0xf]
  %1718 = vst.msk [vmem:[#allocation2] sm:$0xff] %vm130, %v1698
  %1719 = vst.msk [vmem:[#allocation2 + $0x8] sm:$0xff] %vm130, %v1703
  %1720 = vst.msk [vmem:[#allocation2 + $0x10] sm:$0xff] %vm130, %v1708
  %1721 = vst.msk [vmem:[#allocation2 + $0x18] sm:$0xff] %vm130, %v1713
  %1726 = vrot.lane.b32.xlu0 %v1698, 127
  %v1727 = vpop.permute.xlu0 %1726
  %1728 = vrot.lane.b32.xlu0 %v1703, 127
  %v1729 = vpop.permute.xlu0 %1728
  %1730 = vrot.lane.b32.xlu0 %v1708, 127
  %v1731 = vpop.permute.xlu0 %1730
  %1732 = vrot.lane.b32.xlu0 %v1713, 127
  %v1733 = vpop.permute.xlu0 %1732
  %1738 = vst.msk [vmem:[#allocation2 + $0x20] sm:$0xff] %vm130, %v1727
  %1739 = vst.msk [vmem:[#allocation2 + $0x28] sm:$0xff] %vm130, %v1729
  %1740 = vst.msk [vmem:[#allocation2 + $0x30] sm:$0xff] %vm130, %v1731
  %1741 = vst.msk [vmem:[#allocation2 + $0x38] sm:$0xff] %vm130, %v1733
  %1742 = vrot.lane.b32.xlu0 %v1698, 126
  %v1743 = vpop.permute.xlu0 %1742
  %1744 = vrot.lane.b32.xlu0 %v1703, 126
  %v1745 = vpop.permute.xlu0 %1744
  %1746 = vrot.lane.b32.xlu0 %v1708, 126
  %v1747 = vpop.permute.xlu0 %1746
  %1748 = vrot.lane.b32.xlu0 %v1713, 126
  %v1749 = vpop.permute.xlu0 %1748
  %1754 = vst.msk [vmem:[#allocation2 + $0x40] sm:$0xff] %vm130, %v1743
  %1755 = vst.msk [vmem:[#allocation2 + $0x48] sm:$0xff] %vm130, %v1745
  %1756 = vst.msk [vmem:[#allocation2 + $0x50] sm:$0xff] %vm130, %v1747
  %1757 = vst.msk [vmem:[#allocation2 + $0x58] sm:$0xff] %vm130, %v1749
  %v1758 = vld [vmem:[#allocation2] sm:$0xff]
  %v1759 = vld [vmem:[#allocation2 + $0x8] sm:$0xff]
  %v1760 = vld [vmem:[#allocation2 + $0x10] sm:$0xff]
  %v1761 = vld [vmem:[#allocation2 + $0x18] sm:$0xff]
  %v1762 = vld [vmem:[#allocation2 + $0x20] sm:$0xff]
  %v1763 = vld [vmem:[#allocation2 + $0x28] sm:$0xff]
  %v1764 = vld [vmem:[#allocation2 + $0x30] sm:$0xff]
  %v1765 = vld [vmem:[#allocation2 + $0x38] sm:$0xff]
  %v1766 = vld [vmem:[#allocation2 + $0x40] sm:$0xff]
  %v1767 = vld [vmem:[#allocation2 + $0x48] sm:$0xff]
  %v1768 = vld [vmem:[#allocation2 + $0x50] sm:$0xff]
  %v1769 = vld [vmem:[#allocation2 + $0x58] sm:$0xff]
  %1771 = vset.pattern.permute.xlu0 0
  %1772 = vperm.xlu0 %1771, %v1717
  %v1773 = vpop.permute.xlu0 %1772
  %v1776 = vsel %vm499, %v1716, 0
  %1778 = vmatprep.subr.mxu0 0.0
  %1779 = vmatpush1.msra.mxu0 %v1758
  %1780 = vmatprep.subr.mxu0 0.0
  %1781 = vmatpush1.msra.mxu0 %v1759
  %1782 = vmatprep.subr.mxu0 0.0
  %1783 = vmatpush1.msra.mxu0 %v1760
  %1784 = vmatprep.subr.mxu0 0.0
  %1785 = vmatpush1.msra.mxu0 %v1761
  %1786 = vmatprep.subr.mxu0 0.0
  %1787 = vmatpush1.msra.mxu0 %v1762
  %1788 = vmatprep.subr.mxu0 0.0
  %1789 = vmatpush1.msra.mxu0 %v1763
  %1790 = vmatprep.subr.mxu0 0.0
  %1791 = vmatpush1.msra.mxu0 %v1764
  %1792 = vmatprep.subr.mxu0 0.0
  %1793 = vmatpush1.msra.mxu0 %v1765
  %1794 = vmatprep.subr.mxu0 0.0
  %1795 = vmatpush1.msra.mxu0 %v1766
  %1796 = vmatprep.subr.mxu0 0.0
  %1797 = vmatpush1.msra.mxu0 %v1767
  %1798 = vmatprep.subr.mxu0 0.0
  %1799 = vmatpush1.msra.mxu0 %v1768
  %1800 = vmatprep.subr.mxu0 0.0
  %1801 = vmatpush1.msra.mxu0 %v1769
  %1802 = vmatprep.subr.mxu0 0.0
  %1803 = vmatpush1.msra.mxu0 0.0
  %1804 = vmatprep.subr.mxu0 0.0
  %1805 = vmatpush1.msra.mxu0 0.0
  %1806 = vmatprep.subr.mxu0 0.0
  %1807 = vmatpush1.msra.mxu0 0.0
  %1808 = vmatprep.subr.mxu0 0.0
  %1809 = vmatpush1.msra.mxu0 0.0
  %1810 = vmatprep.subr.mxu0 0.0
  %1811 = vmatpush1.msra.mxu0 0.0
  %1812 = vmatprep.subr.mxu0 0.0
  %1813 = vmatpush1.msra.mxu0 0.0
  %1814 = vmatprep.subr.mxu0 0.0
  %1815 = vmatpush1.msra.mxu0 0.0
  %1816 = vmatprep.subr.mxu0 0.0
  %1817 = vmatpush1.msra.mxu0 0.0
  %1818 = vmatprep.subr.mxu0 0.0
  %1819 = vmatpush1.msra.mxu0 0.0
  %1820 = vmatprep.subr.mxu0 0.0
  %1821 = vmatpush1.msra.mxu0 0.0
  %1822 = vmatprep.subr.mxu0 0.0
  %1823 = vmatpush1.msra.mxu0 0.0
  %1824 = vmatprep.subr.mxu0 0.0
  %1825 = vmatpush1.msra.mxu0 0.0
  %1826 = vmatprep.subr.mxu0 0.0
  %1827 = vmatpush1.msra.mxu0 0.0
  %1828 = vmatprep.subr.mxu0 0.0
  %1829 = vmatpush1.msra.mxu0 0.0
  %1830 = vmatprep.subr.mxu0 0.0
  %1831 = vmatpush1.msra.mxu0 0.0
  %1832 = vmatprep.subr.mxu0 0.0
  %1833 = vmatpush1.msra.mxu0 0.0
  %1834 = vmatprep.subr.mxu0 0.0
  %1835 = vmatpush1.msra.mxu0 0.0
  %1836 = vmatprep.subr.mxu0 0.0
  %1837 = vmatpush1.msra.mxu0 0.0
  %1838 = vmatprep.subr.mxu0 0.0
  %1839 = vmatpush1.msra.mxu0 0.0
  %1840 = vmatprep.subr.mxu0 0.0
  %1841 = vmatpush1.msra.mxu0 0.0
  %1842 = vmatprep.mubr.f32.mxu0 0.0
  %1843 = vmatmul.mubr.f32.gmra.mrb[0].mxu0 %v1776
  %v1844 = vpop.f32.mrb[0].mxu0
  %v1845 = vadd.f32 %v1773, %v1844
  %v1846 = vpop.f32.mrb[0].mxu0
  %1847 = vdwg.mxu0
  %vm1848 = vcmask 322560
  %1849 = vst.msk [vmem:[%s11] sm:$0xf] %vm1848, %v1845
  // Predicated region
  $region46: #{conv_residual_net_forward.1} parent=0 // pred_check
    _
  $region47: #{conv_residual_net_forward.1} parent=0 // pred_check_branch
    %1851 = sbr.rel (0) target = $region49
  $region48: #{conv_residual_net_forward.1} parent=0 // pred_region
    _
  $region49: #{conv_residual_net_forward.1} parent=0 // pred_fallthru
    _
  // Predicated region
  $region50: #{conv_residual_net_forward.1} parent=0 // pred_check
    _
  $region51: #{conv_residual_net_forward.1} parent=0 // pred_check_branch
    %1853 = sbr.rel (0) target = $region53
  $region52: #{conv_residual_net_forward.1} parent=0 // pred_region
    _
  $region53: #{conv_residual_net_forward.1} parent=0 // pred_fallthru
    _

</llo_original>
